<compile_context>
chip_gen: v5e
topology: v5e:2x2
jax: 0.10.0
libtpu: 0.0.40
codegen_flags: <defaults>
</compile_context>

<pallas_src>
import math
import functools

import jax
import jax.numpy as jnp
from jax.experimental import pallas as pl
from jax.experimental.pallas import tpu as pltpu

LN_EPS = 1e-5  # torch layer_norm default eps (no affine params in the reference)


def _layer_norm(x):
    mu = jnp.mean(x, axis=-1, keepdims=True)
    xc = x - mu
    var = jnp.mean(xc * xc, axis=-1, keepdims=True)
    return xc * jax.lax.rsqrt(var + LN_EPS)


# ---------------------------------------------------------------------------
# Fused encoder-block kernel (single pallas_call, everything VMEM-resident)
# ---------------------------------------------------------------------------
def encoder_block_kernel(x_ref, cw_ref, cb_ref, wqkv_ref, bqkv_ref,
                         wff_ref, bff_ref, o_ref, *, num_convs, ksize):
    L, H = x_ref.shape
    pad = (ksize - 1) // 2
    # sublane row index, hoisted (used by every tap mask of every conv)
    row = jax.lax.broadcasted_iota(jnp.int32, (L, H), 0)

    out = x_ref[...]                       # positional encoding already added

    # ---- conv sub-blocks: LN -> same-padded width-ksize conv -> residual ----
    # Output-stationary conv: one big-N matmul Z = xn @ [W_0 | ... | W_{k-1}],
    # then y[i] = sum_t Z_t[i + (t - pad)] with zeros outside [0, L).  The
    # per-tap shift is a sublane `pltpu.roll` (XLU) + static mask — no
    # sublane-unaligned slices, all lane slices are multiples of 128.
    for c in range(num_convs):
        xn = _layer_norm(out)
        z = jnp.dot(xn.astype(jnp.bfloat16), cw_ref[c],
                    preferred_element_type=jnp.float32)          # (L, ksize*H)
        y = z[:, pad * H:(pad + 1) * H]                          # centre tap, d = 0
        for t in range(ksize):
            d = t - pad
            if d == 0:
                continue
            zt = pltpu.roll(z[:, t * H:(t + 1) * H], (-d) % L, axis=0)
            if d > 0:
                zt = jnp.where(row < (L - d), zt, 0.0)           # zero bottom d rows
            else:
                zt = jnp.where(row >= (-d), zt, 0.0)             # zero top |d| rows
            y = y + zt
        out = y + cb_ref[c] + out

    # ---- self-attention sub-block (single head, as in the reference) --------
    xn = _layer_norm(out)
    xnb = xn.astype(jnp.bfloat16)
    # fused QKV projection; 1/sqrt(H) already folded into the Q columns/bias
    qkv = jnp.dot(xnb, wqkv_ref[...],
                  preferred_element_type=jnp.float32) + bqkv_ref[...]
    q = qkv[:, 0:H]
    k = qkv[:, H:2 * H]
    v = qkv[:, 2 * H:3 * H]
    s = jax.lax.dot_general(                 # q @ k.T without materializing k.T
        q.astype(jnp.bfloat16), k.astype(jnp.bfloat16),
        dimension_numbers=(((1,), (1,)), ((), ())),
        preferred_element_type=jnp.float32)
    # TODO(synk): replace with flash-style KV-tiled online softmax at
    #             production L (the (L, L) scores do not fit v7x VMEM).
    s = s - jnp.max(s, axis=-1, keepdims=True)
    e = jnp.exp(s)
    p = e * pl.reciprocal(jnp.sum(e, axis=-1, keepdims=True), approx=True)  # EUP
    out = jnp.dot(p.astype(jnp.bfloat16), v.astype(jnp.bfloat16),
                  preferred_element_type=jnp.float32) + out

    # ---- feed-forward sub-block ---------------------------------------------
    xn = _layer_norm(out)
    y = jnp.dot(xn.astype(jnp.bfloat16), wff_ref[...],
                preferred_element_type=jnp.float32) + bff_ref[...]
    out = jnp.maximum(y, 0.0) + out

    o_ref[...] = out


@jax.jit
def encoder_block_forward(x, pe, cw, cb, wqkv, bqkv, wff, bff):
    """One fused pallas_call for the whole encoder block.

    x, pe : (L, H) f32
    cw    : (num_convs, H, ksize*H) bf16   output-stationary conv weights
    cb    : (num_convs, 1, H) f32
    wqkv  : (H, 3H) bf16 (Q cols pre-scaled by 1/sqrt(H));  bqkv : (1, 3H) f32
    wff   : (H, H) bf16;  bff : (1, H) f32
    """
    L, H = x.shape
    num_convs = cw.shape[0]
    ksize = cw.shape[2] // H
    kernel = functools.partial(encoder_block_kernel,
                               num_convs=num_convs, ksize=ksize)
    vmem = pl.BlockSpec(memory_space=pltpu.MemorySpace.VMEM)
    return pl.pallas_call(
        kernel,
        out_shape=jax.ShapeDtypeStruct((L, H), jnp.float32),
        in_specs=[vmem] * 7,
        out_specs=vmem,
        compiler_params=pltpu.CompilerParams(vmem_limit_bytes=32 * 1024 * 1024),
    )(x + pe, cw, cb, wqkv, bqkv, wff, bff)   # PE add folded on the host


# ---------------------------------------------------------------------------
# Parameters / positional encoding (precomputed once outside the kernel)
# ---------------------------------------------------------------------------
def sinusoidal_position_encoding(L, H):
    pos = jnp.arange(L, dtype=jnp.float32)[:, None]              # (L, 1)
    i = jnp.arange(H, dtype=jnp.float32)[None, :]                # (1, H)
    angle_rates = jnp.power(10000.0, -(2.0 * jnp.floor(i / 2.0)) / H)
    angles = pos * angle_rates
    pe = jnp.where((jnp.arange(H)[None, :] % 2) == 0,
                   jnp.sin(angles), jnp.cos(angles))
    return pe.astype(jnp.float32)                                # (L, H)


def init_params(key, hidden_size, num_convs, ksize=7, scale=0.05):
    H = hidden_size
    kcw, kcb, kwl, kbl = jax.random.split(key, 4)
    cw = scale * jax.random.normal(kcw, (num_convs, ksize, H, H), jnp.float32)
    cb = scale * jax.random.normal(kcb, (num_convs, 1, H), jnp.float32)
    wl = scale * jax.random.normal(kwl, (4, H, H), jnp.float32)   # Q, K, V, FF
    bl = scale * jax.random.normal(kbl, (4, 1, H), jnp.float32)

    attn_scale = 1.0 / math.sqrt(float(H))
    # Output-stationary conv layout: [c, h_in, t*H + h_out] = cw[c, t, h_in, h_out]
    cw_os = jnp.transpose(cw, (0, 2, 1, 3)).reshape(num_convs, H, ksize * H)
    # Fused QKV with the attention scale folded into the Q weight AND bias.
    wqkv = jnp.concatenate([wl[0] * attn_scale, wl[1], wl[2]], axis=1)  # (H, 3H)
    bqkv = jnp.concatenate([bl[0] * attn_scale, bl[1], bl[2]], axis=1)  # (1, 3H)

    return {
        # f32 master weights for the reference
        "cw_f32": cw, "cb": cb, "wl_f32": wl, "bl": bl,
        # MXU-native bf16 kernel weights
        "cw": cw_os.astype(jnp.bfloat16),
        "wqkv": wqkv.astype(jnp.bfloat16), "bqkv": bqkv,
        "wff": wl[3].astype(jnp.bfloat16), "bff": bl[3],
    }


# ---------------------------------------------------------------------------
# Pure-JAX reference (same bf16/f32 precision choices) for a correctness check
# ---------------------------------------------------------------------------
def reference_forward(x, pe, params, ksize=7):
    L, H = x.shape
    pad = (ksize - 1) // 2
    cwb = params["cw_f32"].astype(jnp.bfloat16)     # (C, ksize, H, H)
    cb = params["cb"]
    wlb = params["wl_f32"].astype(jnp.bfloat16)
    bl = params["bl"]

    out = x + pe
    for c in range(cwb.shape[0]):
        xn = _layer_norm(out)
        xp = jnp.pad(xn, ((pad, pad), (0, 0))).astype(jnp.bfloat16)
        y = jnp.zeros((L, H), jnp.float32)
        for t in range(ksize):
            y = y + jnp.dot(xp[t:t + L], cwb[c, t], preferred_element_type=jnp.float32)
        out = y + cb[c] + out

    xn = _layer_norm(out).astype(jnp.bfloat16)
    q = jnp.dot(xn, wlb[0], preferred_element_type=jnp.float32) + bl[0]
    k = jnp.dot(xn, wlb[1], preferred_element_type=jnp.float32) + bl[1]
    v = jnp.dot(xn, wlb[2], preferred_element_type=jnp.float32) + bl[2]
    s = jnp.dot(q.astype(jnp.bfloat16), k.astype(jnp.bfloat16).T,
                preferred_element_type=jnp.float32) / math.sqrt(float(H))
    p = jax.nn.softmax(s, axis=-1)
    out = jnp.dot(p.astype(jnp.bfloat16), v.astype(jnp.bfloat16),
                  preferred_element_type=jnp.float32) + out

    xn = _layer_norm(out).astype(jnp.bfloat16)
    out = jnp.maximum(jnp.dot(xn, wlb[3], preferred_element_type=jnp.float32) + bl[3],
                      0.0) + out
    return out


if __name__ == "__main__":
    L, H = 16, 128         # seq_len=16; hidden_size=128 (module default, lane-dense)
    NUM_CONVS, KSIZE = 4, 7

    key = jax.random.PRNGKey(0)
    kx, kp = jax.random.split(key)
    x = jax.random.normal(kx, (L, H), jnp.float32)
    params = init_params(kp, H, NUM_CONVS, KSIZE)
    pe = sinusoidal_position_encoding(L, H)    # constant for fixed (L, H)

    out = encoder_block_forward(x, pe, params["cw"], params["cb"],
                                params["wqkv"], params["bqkv"],
                                params["wff"], params["bff"])
    out = jax.block_until_ready(out)
    assert out.shape == (L, H) and out.dtype == jnp.float32
    assert bool(jnp.all(jnp.isfinite(out)))

    ref = reference_forward(x, pe, params, ksize=KSIZE)
    err = float(jnp.max(jnp.abs(out - ref)))
    assert err < 2e-2, f"Pallas vs reference max abs diff too large: {err}"

    print("KERNEL_OK")
</pallas_src>

<mosaic_0001>
module attributes {stable_mosaic.version = 11 : i64} {
  func.func @encoder_block_kernel(%arg0: memref<16x128xf32, #tpu.memory_space<vmem>>, %arg1: memref<4x128x896xbf16, #tpu.memory_space<vmem>>, %arg2: memref<4x1x128xf32, #tpu.memory_space<vmem>>, %arg3: memref<128x384xbf16, #tpu.memory_space<vmem>>, %arg4: memref<1x384xf32, #tpu.memory_space<vmem>>, %arg5: memref<128x128xbf16, #tpu.memory_space<vmem>>, %arg6: memref<1x128xf32, #tpu.memory_space<vmem>>, %arg7: memref<16x128xf32, #tpu.memory_space<vmem>>) attributes {dimension_semantics = [], scalar_prefetch = 0 : i64, scratch_operands = 0 : i64, tpu.core_type = #tpu.core_type<tc>} {
    %0 = tpu.iota {dimensions = array<i32: 0>} : vector<16x128xi32>
    %c0 = arith.constant 0 : index
    %c0_0 = arith.constant 0 : index
    %1 = vector.load %arg0[%c0, %c0_0] : memref<16x128xf32, #tpu.memory_space<vmem>>, vector<16x128xf32>
    %cst = arith.constant dense<0.000000e+00> : vector<16xf32>
    %2 = vector.multi_reduction <add>, %1, %cst [1] : vector<16x128xf32> to vector<16xf32>
    %3 = vector.shape_cast %2 : vector<16xf32> to vector<16x1xf32>
    %cst_1 = arith.constant 1.280000e+02 : f32
    %4 = vector.broadcast %cst_1 : f32 to vector<16x1xf32>
    %5 = arith.divf %3, %4 : vector<16x1xf32>
    %6 = vector.broadcast %5 : vector<16x1xf32> to vector<16x128xf32>
    %7 = arith.subf %1, %6 : vector<16x128xf32>
    %8 = arith.mulf %7, %7 : vector<16x128xf32>
    %cst_2 = arith.constant dense<0.000000e+00> : vector<16xf32>
    %9 = vector.multi_reduction <add>, %8, %cst_2 [1] : vector<16x128xf32> to vector<16xf32>
    %10 = vector.shape_cast %9 : vector<16xf32> to vector<16x1xf32>
    %cst_3 = arith.constant 1.280000e+02 : f32
    %11 = vector.broadcast %cst_3 : f32 to vector<16x1xf32>
    %12 = arith.divf %10, %11 : vector<16x1xf32>
    %cst_4 = arith.constant 9.99999974E-6 : f32
    %13 = vector.broadcast %cst_4 : f32 to vector<16x1xf32>
    %14 = arith.addf %12, %13 : vector<16x1xf32>
    %15 = math.rsqrt %14 : vector<16x1xf32>
    %16 = vector.broadcast %15 : vector<16x1xf32> to vector<16x128xf32>
    %17 = arith.mulf %7, %16 : vector<16x128xf32>
    %18 = arith.truncf %17 : vector<16x128xf32> to vector<16x128xbf16>
    %c0_5 = arith.constant 0 : index
    %c0_6 = arith.constant 0 : index
    %c0_7 = arith.constant 0 : index
    %19 = vector.load %arg1[%c0_5, %c0_6, %c0_7] : memref<4x128x896xbf16, #tpu.memory_space<vmem>>, vector<1x128x896xbf16>
    %20 = vector.shape_cast %19 : vector<1x128x896xbf16> to vector<128x896xbf16>
    %cst_8 = arith.constant dense<0.000000e+00> : vector<16x896xf32>
    %21 = tpu.matmul %18, %20, %cst_8 {dimension_numbers = #tpu.dot_dimension_numbers<[1], [0], [0], [1], [0, 0, 1, 1], [], []>} : vector<16x128xbf16>, vector<128x896xbf16>, vector<16x896xf32> -> vector<16x896xf32>
    %22 = vector.extract_strided_slice %21 {offsets = [0, 384], sizes = [16, 128], strides = [1, 1]} : vector<16x896xf32> to vector<16x128xf32>
    %23 = vector.extract_strided_slice %21 {offsets = [0, 0], sizes = [16, 128], strides = [1, 1]} : vector<16x896xf32> to vector<16x128xf32>
    %c3_i32 = arith.constant 3 : i32
    %24 = tpu.dynamic_rotate %23 by %c3_i32 dim 0 : vector<16x128xf32>, i32 -> vector<16x128xf32>
    %c3_i32_9 = arith.constant 3 : i32
    %25 = vector.broadcast %c3_i32_9 : i32 to vector<16x128xi32>
    %26 = arith.cmpi sge, %0, %25 : vector<16x128xi32>
    %cst_10 = arith.constant 0.000000e+00 : f32
    %27 = vector.broadcast %cst_10 : f32 to vector<16x128xf32>
    %28 = arith.select %26, %24, %27 : vector<16x128xi1>, vector<16x128xf32>
    %29 = arith.addf %22, %28 : vector<16x128xf32>
    %30 = vector.extract_strided_slice %21 {offsets = [0, 128], sizes = [16, 128], strides = [1, 1]} : vector<16x896xf32> to vector<16x128xf32>
    %c2_i32 = arith.constant 2 : i32
    %31 = tpu.dynamic_rotate %30 by %c2_i32 dim 0 : vector<16x128xf32>, i32 -> vector<16x128xf32>
    %c2_i32_11 = arith.constant 2 : i32
    %32 = vector.broadcast %c2_i32_11 : i32 to vector<16x128xi32>
    %33 = arith.cmpi sge, %0, %32 : vector<16x128xi32>
    %cst_12 = arith.constant 0.000000e+00 : f32
    %34 = vector.broadcast %cst_12 : f32 to vector<16x128xf32>
    %35 = arith.select %33, %31, %34 : vector<16x128xi1>, vector<16x128xf32>
    %36 = arith.addf %29, %35 : vector<16x128xf32>
    %37 = vector.extract_strided_slice %21 {offsets = [0, 256], sizes = [16, 128], strides = [1, 1]} : vector<16x896xf32> to vector<16x128xf32>
    %c1_i32 = arith.constant 1 : i32
    %38 = tpu.dynamic_rotate %37 by %c1_i32 dim 0 : vector<16x128xf32>, i32 -> vector<16x128xf32>
    %c1_i32_13 = arith.constant 1 : i32
    %39 = vector.broadcast %c1_i32_13 : i32 to vector<16x128xi32>
    %40 = arith.cmpi sge, %0, %39 : vector<16x128xi32>
    %cst_14 = arith.constant 0.000000e+00 : f32
    %41 = vector.broadcast %cst_14 : f32 to vector<16x128xf32>
    %42 = arith.select %40, %38, %41 : vector<16x128xi1>, vector<16x128xf32>
    %43 = arith.addf %36, %42 : vector<16x128xf32>
    %44 = vector.extract_strided_slice %21 {offsets = [0, 512], sizes = [16, 128], strides = [1, 1]} : vector<16x896xf32> to vector<16x128xf32>
    %c15_i32 = arith.constant 15 : i32
    %45 = tpu.dynamic_rotate %44 by %c15_i32 dim 0 : vector<16x128xf32>, i32 -> vector<16x128xf32>
    %c15_i32_15 = arith.constant 15 : i32
    %46 = vector.broadcast %c15_i32_15 : i32 to vector<16x128xi32>
    %47 = arith.cmpi slt, %0, %46 : vector<16x128xi32>
    %cst_16 = arith.constant 0.000000e+00 : f32
    %48 = vector.broadcast %cst_16 : f32 to vector<16x128xf32>
    %49 = arith.select %47, %45, %48 : vector<16x128xi1>, vector<16x128xf32>
    %50 = arith.addf %43, %49 : vector<16x128xf32>
    %51 = vector.extract_strided_slice %21 {offsets = [0, 640], sizes = [16, 128], strides = [1, 1]} : vector<16x896xf32> to vector<16x128xf32>
    %c14_i32 = arith.constant 14 : i32
    %52 = tpu.dynamic_rotate %51 by %c14_i32 dim 0 : vector<16x128xf32>, i32 -> vector<16x128xf32>
    %c14_i32_17 = arith.constant 14 : i32
    %53 = vector.broadcast %c14_i32_17 : i32 to vector<16x128xi32>
    %54 = arith.cmpi slt, %0, %53 : vector<16x128xi32>
    %cst_18 = arith.constant 0.000000e+00 : f32
    %55 = vector.broadcast %cst_18 : f32 to vector<16x128xf32>
    %56 = arith.select %54, %52, %55 : vector<16x128xi1>, vector<16x128xf32>
    %57 = arith.addf %50, %56 : vector<16x128xf32>
    %58 = vector.extract_strided_slice %21 {offsets = [0, 768], sizes = [16, 128], strides = [1, 1]} : vector<16x896xf32> to vector<16x128xf32>
    %c13_i32 = arith.constant 13 : i32
    %59 = tpu.dynamic_rotate %58 by %c13_i32 dim 0 : vector<16x128xf32>, i32 -> vector<16x128xf32>
    %c13_i32_19 = arith.constant 13 : i32
    %60 = vector.broadcast %c13_i32_19 : i32 to vector<16x128xi32>
    %61 = arith.cmpi slt, %0, %60 : vector<16x128xi32>
    %cst_20 = arith.constant 0.000000e+00 : f32
    %62 = vector.broadcast %cst_20 : f32 to vector<16x128xf32>
    %63 = arith.select %61, %59, %62 : vector<16x128xi1>, vector<16x128xf32>
    %64 = arith.addf %57, %63 : vector<16x128xf32>
    %c0_21 = arith.constant 0 : index
    %c0_22 = arith.constant 0 : index
    %c0_23 = arith.constant 0 : index
    %65 = vector.load %arg2[%c0_21, %c0_22, %c0_23] : memref<4x1x128xf32, #tpu.memory_space<vmem>>, vector<1x1x128xf32>
    %66 = vector.shape_cast %65 : vector<1x1x128xf32> to vector<1x128xf32>
    %67 = vector.broadcast %66 : vector<1x128xf32> to vector<16x128xf32>
    %68 = arith.addf %64, %67 : vector<16x128xf32>
    %69 = arith.addf %68, %1 : vector<16x128xf32>
    %cst_24 = arith.constant dense<0.000000e+00> : vector<16xf32>
    %70 = vector.multi_reduction <add>, %69, %cst_24 [1] : vector<16x128xf32> to vector<16xf32>
    %71 = vector.shape_cast %70 : vector<16xf32> to vector<16x1xf32>
    %cst_25 = arith.constant 1.280000e+02 : f32
    %72 = vector.broadcast %cst_25 : f32 to vector<16x1xf32>
    %73 = arith.divf %71, %72 : vector<16x1xf32>
    %74 = vector.broadcast %73 : vector<16x1xf32> to vector<16x128xf32>
    %75 = arith.subf %69, %74 : vector<16x128xf32>
    %76 = arith.mulf %75, %75 : vector<16x128xf32>
    %cst_26 = arith.constant dense<0.000000e+00> : vector<16xf32>
    %77 = vector.multi_reduction <add>, %76, %cst_26 [1] : vector<16x128xf32> to vector<16xf32>
    %78 = vector.shape_cast %77 : vector<16xf32> to vector<16x1xf32>
    %cst_27 = arith.constant 1.280000e+02 : f32
    %79 = vector.broadcast %cst_27 : f32 to vector<16x1xf32>
    %80 = arith.divf %78, %79 : vector<16x1xf32>
    %cst_28 = arith.constant 9.99999974E-6 : f32
    %81 = vector.broadcast %cst_28 : f32 to vector<16x1xf32>
    %82 = arith.addf %80, %81 : vector<16x1xf32>
    %83 = math.rsqrt %82 : vector<16x1xf32>
    %84 = vector.broadcast %83 : vector<16x1xf32> to vector<16x128xf32>
    %85 = arith.mulf %75, %84 : vector<16x128xf32>
    %86 = arith.truncf %85 : vector<16x128xf32> to vector<16x128xbf16>
    %c1 = arith.constant 1 : index
    %c0_29 = arith.constant 0 : index
    %c0_30 = arith.constant 0 : index
    %87 = vector.load %arg1[%c1, %c0_29, %c0_30] : memref<4x128x896xbf16, #tpu.memory_space<vmem>>, vector<1x128x896xbf16>
    %88 = vector.shape_cast %87 : vector<1x128x896xbf16> to vector<128x896xbf16>
    %cst_31 = arith.constant dense<0.000000e+00> : vector<16x896xf32>
    %89 = tpu.matmul %86, %88, %cst_31 {dimension_numbers = #tpu.dot_dimension_numbers<[1], [0], [0], [1], [0, 0, 1, 1], [], []>} : vector<16x128xbf16>, vector<128x896xbf16>, vector<16x896xf32> -> vector<16x896xf32>
    %90 = vector.extract_strided_slice %89 {offsets = [0, 384], sizes = [16, 128], strides = [1, 1]} : vector<16x896xf32> to vector<16x128xf32>
    %91 = vector.extract_strided_slice %89 {offsets = [0, 0], sizes = [16, 128], strides = [1, 1]} : vector<16x896xf32> to vector<16x128xf32>
    %c3_i32_32 = arith.constant 3 : i32
    %92 = tpu.dynamic_rotate %91 by %c3_i32_32 dim 0 : vector<16x128xf32>, i32 -> vector<16x128xf32>
    %c3_i32_33 = arith.constant 3 : i32
    %93 = vector.broadcast %c3_i32_33 : i32 to vector<16x128xi32>
    %94 = arith.cmpi sge, %0, %93 : vector<16x128xi32>
    %cst_34 = arith.constant 0.000000e+00 : f32
    %95 = vector.broadcast %cst_34 : f32 to vector<16x128xf32>
    %96 = arith.select %94, %92, %95 : vector<16x128xi1>, vector<16x128xf32>
    %97 = arith.addf %90, %96 : vector<16x128xf32>
    %98 = vector.extract_strided_slice %89 {offsets = [0, 128], sizes = [16, 128], strides = [1, 1]} : vector<16x896xf32> to vector<16x128xf32>
    %c2_i32_35 = arith.constant 2 : i32
    %99 = tpu.dynamic_rotate %98 by %c2_i32_35 dim 0 : vector<16x128xf32>, i32 -> vector<16x128xf32>
    %c2_i32_36 = arith.constant 2 : i32
    %100 = vector.broadcast %c2_i32_36 : i32 to vector<16x128xi32>
    %101 = arith.cmpi sge, %0, %100 : vector<16x128xi32>
    %cst_37 = arith.constant 0.000000e+00 : f32
    %102 = vector.broadcast %cst_37 : f32 to vector<16x128xf32>
    %103 = arith.select %101, %99, %102 : vector<16x128xi1>, vector<16x128xf32>
    %104 = arith.addf %97, %103 : vector<16x128xf32>
    %105 = vector.extract_strided_slice %89 {offsets = [0, 256], sizes = [16, 128], strides = [1, 1]} : vector<16x896xf32> to vector<16x128xf32>
    %c1_i32_38 = arith.constant 1 : i32
    %106 = tpu.dynamic_rotate %105 by %c1_i32_38 dim 0 : vector<16x128xf32>, i32 -> vector<16x128xf32>
    %c1_i32_39 = arith.constant 1 : i32
    %107 = vector.broadcast %c1_i32_39 : i32 to vector<16x128xi32>
    %108 = arith.cmpi sge, %0, %107 : vector<16x128xi32>
    %cst_40 = arith.constant 0.000000e+00 : f32
    %109 = vector.broadcast %cst_40 : f32 to vector<16x128xf32>
    %110 = arith.select %108, %106, %109 : vector<16x128xi1>, vector<16x128xf32>
    %111 = arith.addf %104, %110 : vector<16x128xf32>
    %112 = vector.extract_strided_slice %89 {offsets = [0, 512], sizes = [16, 128], strides = [1, 1]} : vector<16x896xf32> to vector<16x128xf32>
    %c15_i32_41 = arith.constant 15 : i32
    %113 = tpu.dynamic_rotate %112 by %c15_i32_41 dim 0 : vector<16x128xf32>, i32 -> vector<16x128xf32>
    %c15_i32_42 = arith.constant 15 : i32
    %114 = vector.broadcast %c15_i32_42 : i32 to vector<16x128xi32>
    %115 = arith.cmpi slt, %0, %114 : vector<16x128xi32>
    %cst_43 = arith.constant 0.000000e+00 : f32
    %116 = vector.broadcast %cst_43 : f32 to vector<16x128xf32>
    %117 = arith.select %115, %113, %116 : vector<16x128xi1>, vector<16x128xf32>
    %118 = arith.addf %111, %117 : vector<16x128xf32>
    %119 = vector.extract_strided_slice %89 {offsets = [0, 640], sizes = [16, 128], strides = [1, 1]} : vector<16x896xf32> to vector<16x128xf32>
    %c14_i32_44 = arith.constant 14 : i32
    %120 = tpu.dynamic_rotate %119 by %c14_i32_44 dim 0 : vector<16x128xf32>, i32 -> vector<16x128xf32>
    %c14_i32_45 = arith.constant 14 : i32
    %121 = vector.broadcast %c14_i32_45 : i32 to vector<16x128xi32>
    %122 = arith.cmpi slt, %0, %121 : vector<16x128xi32>
    %cst_46 = arith.constant 0.000000e+00 : f32
    %123 = vector.broadcast %cst_46 : f32 to vector<16x128xf32>
    %124 = arith.select %122, %120, %123 : vector<16x128xi1>, vector<16x128xf32>
    %125 = arith.addf %118, %124 : vector<16x128xf32>
    %126 = vector.extract_strided_slice %89 {offsets = [0, 768], sizes = [16, 128], strides = [1, 1]} : vector<16x896xf32> to vector<16x128xf32>
    %c13_i32_47 = arith.constant 13 : i32
    %127 = tpu.dynamic_rotate %126 by %c13_i32_47 dim 0 : vector<16x128xf32>, i32 -> vector<16x128xf32>
    %c13_i32_48 = arith.constant 13 : i32
    %128 = vector.broadcast %c13_i32_48 : i32 to vector<16x128xi32>
    %129 = arith.cmpi slt, %0, %128 : vector<16x128xi32>
    %cst_49 = arith.constant 0.000000e+00 : f32
    %130 = vector.broadcast %cst_49 : f32 to vector<16x128xf32>
    %131 = arith.select %129, %127, %130 : vector<16x128xi1>, vector<16x128xf32>
    %132 = arith.addf %125, %131 : vector<16x128xf32>
    %c1_50 = arith.constant 1 : index
    %c0_51 = arith.constant 0 : index
    %c0_52 = arith.constant 0 : index
    %133 = vector.load %arg2[%c1_50, %c0_51, %c0_52] : memref<4x1x128xf32, #tpu.memory_space<vmem>>, vector<1x1x128xf32>
    %134 = vector.shape_cast %133 : vector<1x1x128xf32> to vector<1x128xf32>
    %135 = vector.broadcast %134 : vector<1x128xf32> to vector<16x128xf32>
    %136 = arith.addf %132, %135 : vector<16x128xf32>
    %137 = arith.addf %136, %69 : vector<16x128xf32>
    %cst_53 = arith.constant dense<0.000000e+00> : vector<16xf32>
    %138 = vector.multi_reduction <add>, %137, %cst_53 [1] : vector<16x128xf32> to vector<16xf32>
    %139 = vector.shape_cast %138 : vector<16xf32> to vector<16x1xf32>
    %cst_54 = arith.constant 1.280000e+02 : f32
    %140 = vector.broadcast %cst_54 : f32 to vector<16x1xf32>
    %141 = arith.divf %139, %140 : vector<16x1xf32>
    %142 = vector.broadcast %141 : vector<16x1xf32> to vector<16x128xf32>
    %143 = arith.subf %137, %142 : vector<16x128xf32>
    %144 = arith.mulf %143, %143 : vector<16x128xf32>
    %cst_55 = arith.constant dense<0.000000e+00> : vector<16xf32>
    %145 = vector.multi_reduction <add>, %144, %cst_55 [1] : vector<16x128xf32> to vector<16xf32>
    %146 = vector.shape_cast %145 : vector<16xf32> to vector<16x1xf32>
    %cst_56 = arith.constant 1.280000e+02 : f32
    %147 = vector.broadcast %cst_56 : f32 to vector<16x1xf32>
    %148 = arith.divf %146, %147 : vector<16x1xf32>
    %cst_57 = arith.constant 9.99999974E-6 : f32
    %149 = vector.broadcast %cst_57 : f32 to vector<16x1xf32>
    %150 = arith.addf %148, %149 : vector<16x1xf32>
    %151 = math.rsqrt %150 : vector<16x1xf32>
    %152 = vector.broadcast %151 : vector<16x1xf32> to vector<16x128xf32>
    %153 = arith.mulf %143, %152 : vector<16x128xf32>
    %154 = arith.truncf %153 : vector<16x128xf32> to vector<16x128xbf16>
    %c2 = arith.constant 2 : index
    %c0_58 = arith.constant 0 : index
    %c0_59 = arith.constant 0 : index
    %155 = vector.load %arg1[%c2, %c0_58, %c0_59] : memref<4x128x896xbf16, #tpu.memory_space<vmem>>, vector<1x128x896xbf16>
    %156 = vector.shape_cast %155 : vector<1x128x896xbf16> to vector<128x896xbf16>
    %cst_60 = arith.constant dense<0.000000e+00> : vector<16x896xf32>
    %157 = tpu.matmul %154, %156, %cst_60 {dimension_numbers = #tpu.dot_dimension_numbers<[1], [0], [0], [1], [0, 0, 1, 1], [], []>} : vector<16x128xbf16>, vector<128x896xbf16>, vector<16x896xf32> -> vector<16x896xf32>
    %158 = vector.extract_strided_slice %157 {offsets = [0, 384], sizes = [16, 128], strides = [1, 1]} : vector<16x896xf32> to vector<16x128xf32>
    %159 = vector.extract_strided_slice %157 {offsets = [0, 0], sizes = [16, 128], strides = [1, 1]} : vector<16x896xf32> to vector<16x128xf32>
    %c3_i32_61 = arith.constant 3 : i32
    %160 = tpu.dynamic_rotate %159 by %c3_i32_61 dim 0 : vector<16x128xf32>, i32 -> vector<16x128xf32>
    %c3_i32_62 = arith.constant 3 : i32
    %161 = vector.broadcast %c3_i32_62 : i32 to vector<16x128xi32>
    %162 = arith.cmpi sge, %0, %161 : vector<16x128xi32>
    %cst_63 = arith.constant 0.000000e+00 : f32
    %163 = vector.broadcast %cst_63 : f32 to vector<16x128xf32>
    %164 = arith.select %162, %160, %163 : vector<16x128xi1>, vector<16x128xf32>
    %165 = arith.addf %158, %164 : vector<16x128xf32>
    %166 = vector.extract_strided_slice %157 {offsets = [0, 128], sizes = [16, 128], strides = [1, 1]} : vector<16x896xf32> to vector<16x128xf32>
    %c2_i32_64 = arith.constant 2 : i32
    %167 = tpu.dynamic_rotate %166 by %c2_i32_64 dim 0 : vector<16x128xf32>, i32 -> vector<16x128xf32>
    %c2_i32_65 = arith.constant 2 : i32
    %168 = vector.broadcast %c2_i32_65 : i32 to vector<16x128xi32>
    %169 = arith.cmpi sge, %0, %168 : vector<16x128xi32>
    %cst_66 = arith.constant 0.000000e+00 : f32
    %170 = vector.broadcast %cst_66 : f32 to vector<16x128xf32>
    %171 = arith.select %169, %167, %170 : vector<16x128xi1>, vector<16x128xf32>
    %172 = arith.addf %165, %171 : vector<16x128xf32>
    %173 = vector.extract_strided_slice %157 {offsets = [0, 256], sizes = [16, 128], strides = [1, 1]} : vector<16x896xf32> to vector<16x128xf32>
    %c1_i32_67 = arith.constant 1 : i32
    %174 = tpu.dynamic_rotate %173 by %c1_i32_67 dim 0 : vector<16x128xf32>, i32 -> vector<16x128xf32>
    %c1_i32_68 = arith.constant 1 : i32
    %175 = vector.broadcast %c1_i32_68 : i32 to vector<16x128xi32>
    %176 = arith.cmpi sge, %0, %175 : vector<16x128xi32>
    %cst_69 = arith.constant 0.000000e+00 : f32
    %177 = vector.broadcast %cst_69 : f32 to vector<16x128xf32>
    %178 = arith.select %176, %174, %177 : vector<16x128xi1>, vector<16x128xf32>
    %179 = arith.addf %172, %178 : vector<16x128xf32>
    %180 = vector.extract_strided_slice %157 {offsets = [0, 512], sizes = [16, 128], strides = [1, 1]} : vector<16x896xf32> to vector<16x128xf32>
    %c15_i32_70 = arith.constant 15 : i32
    %181 = tpu.dynamic_rotate %180 by %c15_i32_70 dim 0 : vector<16x128xf32>, i32 -> vector<16x128xf32>
    %c15_i32_71 = arith.constant 15 : i32
    %182 = vector.broadcast %c15_i32_71 : i32 to vector<16x128xi32>
    %183 = arith.cmpi slt, %0, %182 : vector<16x128xi32>
    %cst_72 = arith.constant 0.000000e+00 : f32
    %184 = vector.broadcast %cst_72 : f32 to vector<16x128xf32>
    %185 = arith.select %183, %181, %184 : vector<16x128xi1>, vector<16x128xf32>
    %186 = arith.addf %179, %185 : vector<16x128xf32>
    %187 = vector.extract_strided_slice %157 {offsets = [0, 640], sizes = [16, 128], strides = [1, 1]} : vector<16x896xf32> to vector<16x128xf32>
    %c14_i32_73 = arith.constant 14 : i32
    %188 = tpu.dynamic_rotate %187 by %c14_i32_73 dim 0 : vector<16x128xf32>, i32 -> vector<16x128xf32>
    %c14_i32_74 = arith.constant 14 : i32
    %189 = vector.broadcast %c14_i32_74 : i32 to vector<16x128xi32>
    %190 = arith.cmpi slt, %0, %189 : vector<16x128xi32>
    %cst_75 = arith.constant 0.000000e+00 : f32
    %191 = vector.broadcast %cst_75 : f32 to vector<16x128xf32>
    %192 = arith.select %190, %188, %191 : vector<16x128xi1>, vector<16x128xf32>
    %193 = arith.addf %186, %192 : vector<16x128xf32>
    %194 = vector.extract_strided_slice %157 {offsets = [0, 768], sizes = [16, 128], strides = [1, 1]} : vector<16x896xf32> to vector<16x128xf32>
    %c13_i32_76 = arith.constant 13 : i32
    %195 = tpu.dynamic_rotate %194 by %c13_i32_76 dim 0 : vector<16x128xf32>, i32 -> vector<16x128xf32>
    %c13_i32_77 = arith.constant 13 : i32
    %196 = vector.broadcast %c13_i32_77 : i32 to vector<16x128xi32>
    %197 = arith.cmpi slt, %0, %196 : vector<16x128xi32>
    %cst_78 = arith.constant 0.000000e+00 : f32
    %198 = vector.broadcast %cst_78 : f32 to vector<16x128xf32>
    %199 = arith.select %197, %195, %198 : vector<16x128xi1>, vector<16x128xf32>
    %200 = arith.addf %193, %199 : vector<16x128xf32>
    %c2_79 = arith.constant 2 : index
    %c0_80 = arith.constant 0 : index
    %c0_81 = arith.constant 0 : index
    %201 = vector.load %arg2[%c2_79, %c0_80, %c0_81] : memref<4x1x128xf32, #tpu.memory_space<vmem>>, vector<1x1x128xf32>
    %202 = vector.shape_cast %201 : vector<1x1x128xf32> to vector<1x128xf32>
    %203 = vector.broadcast %202 : vector<1x128xf32> to vector<16x128xf32>
    %204 = arith.addf %200, %203 : vector<16x128xf32>
    %205 = arith.addf %204, %137 : vector<16x128xf32>
    %cst_82 = arith.constant dense<0.000000e+00> : vector<16xf32>
    %206 = vector.multi_reduction <add>, %205, %cst_82 [1] : vector<16x128xf32> to vector<16xf32>
    %207 = vector.shape_cast %206 : vector<16xf32> to vector<16x1xf32>
    %cst_83 = arith.constant 1.280000e+02 : f32
    %208 = vector.broadcast %cst_83 : f32 to vector<16x1xf32>
    %209 = arith.divf %207, %208 : vector<16x1xf32>
    %210 = vector.broadcast %209 : vector<16x1xf32> to vector<16x128xf32>
    %211 = arith.subf %205, %210 : vector<16x128xf32>
    %212 = arith.mulf %211, %211 : vector<16x128xf32>
    %cst_84 = arith.constant dense<0.000000e+00> : vector<16xf32>
    %213 = vector.multi_reduction <add>, %212, %cst_84 [1] : vector<16x128xf32> to vector<16xf32>
    %214 = vector.shape_cast %213 : vector<16xf32> to vector<16x1xf32>
    %cst_85 = arith.constant 1.280000e+02 : f32
    %215 = vector.broadcast %cst_85 : f32 to vector<16x1xf32>
    %216 = arith.divf %214, %215 : vector<16x1xf32>
    %cst_86 = arith.constant 9.99999974E-6 : f32
    %217 = vector.broadcast %cst_86 : f32 to vector<16x1xf32>
    %218 = arith.addf %216, %217 : vector<16x1xf32>
    %219 = math.rsqrt %218 : vector<16x1xf32>
    %220 = vector.broadcast %219 : vector<16x1xf32> to vector<16x128xf32>
    %221 = arith.mulf %211, %220 : vector<16x128xf32>
    %222 = arith.truncf %221 : vector<16x128xf32> to vector<16x128xbf16>
    %c3 = arith.constant 3 : index
    %c0_87 = arith.constant 0 : index
    %c0_88 = arith.constant 0 : index
    %223 = vector.load %arg1[%c3, %c0_87, %c0_88] : memref<4x128x896xbf16, #tpu.memory_space<vmem>>, vector<1x128x896xbf16>
    %224 = vector.shape_cast %223 : vector<1x128x896xbf16> to vector<128x896xbf16>
    %cst_89 = arith.constant dense<0.000000e+00> : vector<16x896xf32>
    %225 = tpu.matmul %222, %224, %cst_89 {dimension_numbers = #tpu.dot_dimension_numbers<[1], [0], [0], [1], [0, 0, 1, 1], [], []>} : vector<16x128xbf16>, vector<128x896xbf16>, vector<16x896xf32> -> vector<16x896xf32>
    %226 = vector.extract_strided_slice %225 {offsets = [0, 384], sizes = [16, 128], strides = [1, 1]} : vector<16x896xf32> to vector<16x128xf32>
    %227 = vector.extract_strided_slice %225 {offsets = [0, 0], sizes = [16, 128], strides = [1, 1]} : vector<16x896xf32> to vector<16x128xf32>
    %c3_i32_90 = arith.constant 3 : i32
    %228 = tpu.dynamic_rotate %227 by %c3_i32_90 dim 0 : vector<16x128xf32>, i32 -> vector<16x128xf32>
    %c3_i32_91 = arith.constant 3 : i32
    %229 = vector.broadcast %c3_i32_91 : i32 to vector<16x128xi32>
    %230 = arith.cmpi sge, %0, %229 : vector<16x128xi32>
    %cst_92 = arith.constant 0.000000e+00 : f32
    %231 = vector.broadcast %cst_92 : f32 to vector<16x128xf32>
    %232 = arith.select %230, %228, %231 : vector<16x128xi1>, vector<16x128xf32>
    %233 = arith.addf %226, %232 : vector<16x128xf32>
    %234 = vector.extract_strided_slice %225 {offsets = [0, 128], sizes = [16, 128], strides = [1, 1]} : vector<16x896xf32> to vector<16x128xf32>
    %c2_i32_93 = arith.constant 2 : i32
    %235 = tpu.dynamic_rotate %234 by %c2_i32_93 dim 0 : vector<16x128xf32>, i32 -> vector<16x128xf32>
    %c2_i32_94 = arith.constant 2 : i32
    %236 = vector.broadcast %c2_i32_94 : i32 to vector<16x128xi32>
    %237 = arith.cmpi sge, %0, %236 : vector<16x128xi32>
    %cst_95 = arith.constant 0.000000e+00 : f32
    %238 = vector.broadcast %cst_95 : f32 to vector<16x128xf32>
    %239 = arith.select %237, %235, %238 : vector<16x128xi1>, vector<16x128xf32>
    %240 = arith.addf %233, %239 : vector<16x128xf32>
    %241 = vector.extract_strided_slice %225 {offsets = [0, 256], sizes = [16, 128], strides = [1, 1]} : vector<16x896xf32> to vector<16x128xf32>
    %c1_i32_96 = arith.constant 1 : i32
    %242 = tpu.dynamic_rotate %241 by %c1_i32_96 dim 0 : vector<16x128xf32>, i32 -> vector<16x128xf32>
    %c1_i32_97 = arith.constant 1 : i32
    %243 = vector.broadcast %c1_i32_97 : i32 to vector<16x128xi32>
    %244 = arith.cmpi sge, %0, %243 : vector<16x128xi32>
    %cst_98 = arith.constant 0.000000e+00 : f32
    %245 = vector.broadcast %cst_98 : f32 to vector<16x128xf32>
    %246 = arith.select %244, %242, %245 : vector<16x128xi1>, vector<16x128xf32>
    %247 = arith.addf %240, %246 : vector<16x128xf32>
    %248 = vector.extract_strided_slice %225 {offsets = [0, 512], sizes = [16, 128], strides = [1, 1]} : vector<16x896xf32> to vector<16x128xf32>
    %c15_i32_99 = arith.constant 15 : i32
    %249 = tpu.dynamic_rotate %248 by %c15_i32_99 dim 0 : vector<16x128xf32>, i32 -> vector<16x128xf32>
    %c15_i32_100 = arith.constant 15 : i32
    %250 = vector.broadcast %c15_i32_100 : i32 to vector<16x128xi32>
    %251 = arith.cmpi slt, %0, %250 : vector<16x128xi32>
    %cst_101 = arith.constant 0.000000e+00 : f32
    %252 = vector.broadcast %cst_101 : f32 to vector<16x128xf32>
    %253 = arith.select %251, %249, %252 : vector<16x128xi1>, vector<16x128xf32>
    %254 = arith.addf %247, %253 : vector<16x128xf32>
    %255 = vector.extract_strided_slice %225 {offsets = [0, 640], sizes = [16, 128], strides = [1, 1]} : vector<16x896xf32> to vector<16x128xf32>
    %c14_i32_102 = arith.constant 14 : i32
    %256 = tpu.dynamic_rotate %255 by %c14_i32_102 dim 0 : vector<16x128xf32>, i32 -> vector<16x128xf32>
    %c14_i32_103 = arith.constant 14 : i32
    %257 = vector.broadcast %c14_i32_103 : i32 to vector<16x128xi32>
    %258 = arith.cmpi slt, %0, %257 : vector<16x128xi32>
    %cst_104 = arith.constant 0.000000e+00 : f32
    %259 = vector.broadcast %cst_104 : f32 to vector<16x128xf32>
    %260 = arith.select %258, %256, %259 : vector<16x128xi1>, vector<16x128xf32>
    %261 = arith.addf %254, %260 : vector<16x128xf32>
    %262 = vector.extract_strided_slice %225 {offsets = [0, 768], sizes = [16, 128], strides = [1, 1]} : vector<16x896xf32> to vector<16x128xf32>
    %c13_i32_105 = arith.constant 13 : i32
    %263 = tpu.dynamic_rotate %262 by %c13_i32_105 dim 0 : vector<16x128xf32>, i32 -> vector<16x128xf32>
    %c13_i32_106 = arith.constant 13 : i32
    %264 = vector.broadcast %c13_i32_106 : i32 to vector<16x128xi32>
    %265 = arith.cmpi slt, %0, %264 : vector<16x128xi32>
    %cst_107 = arith.constant 0.000000e+00 : f32
    %266 = vector.broadcast %cst_107 : f32 to vector<16x128xf32>
    %267 = arith.select %265, %263, %266 : vector<16x128xi1>, vector<16x128xf32>
    %268 = arith.addf %261, %267 : vector<16x128xf32>
    %c3_108 = arith.constant 3 : index
    %c0_109 = arith.constant 0 : index
    %c0_110 = arith.constant 0 : index
    %269 = vector.load %arg2[%c3_108, %c0_109, %c0_110] : memref<4x1x128xf32, #tpu.memory_space<vmem>>, vector<1x1x128xf32>
    %270 = vector.shape_cast %269 : vector<1x1x128xf32> to vector<1x128xf32>
    %271 = vector.broadcast %270 : vector<1x128xf32> to vector<16x128xf32>
    %272 = arith.addf %268, %271 : vector<16x128xf32>
    %273 = arith.addf %272, %205 : vector<16x128xf32>
    %cst_111 = arith.constant dense<0.000000e+00> : vector<16xf32>
    %274 = vector.multi_reduction <add>, %273, %cst_111 [1] : vector<16x128xf32> to vector<16xf32>
    %275 = vector.shape_cast %274 : vector<16xf32> to vector<16x1xf32>
    %cst_112 = arith.constant 1.280000e+02 : f32
    %276 = vector.broadcast %cst_112 : f32 to vector<16x1xf32>
    %277 = arith.divf %275, %276 : vector<16x1xf32>
    %278 = vector.broadcast %277 : vector<16x1xf32> to vector<16x128xf32>
    %279 = arith.subf %273, %278 : vector<16x128xf32>
    %280 = arith.mulf %279, %279 : vector<16x128xf32>
    %cst_113 = arith.constant dense<0.000000e+00> : vector<16xf32>
    %281 = vector.multi_reduction <add>, %280, %cst_113 [1] : vector<16x128xf32> to vector<16xf32>
    %282 = vector.shape_cast %281 : vector<16xf32> to vector<16x1xf32>
    %cst_114 = arith.constant 1.280000e+02 : f32
    %283 = vector.broadcast %cst_114 : f32 to vector<16x1xf32>
    %284 = arith.divf %282, %283 : vector<16x1xf32>
    %cst_115 = arith.constant 9.99999974E-6 : f32
    %285 = vector.broadcast %cst_115 : f32 to vector<16x1xf32>
    %286 = arith.addf %284, %285 : vector<16x1xf32>
    %287 = math.rsqrt %286 : vector<16x1xf32>
    %288 = vector.broadcast %287 : vector<16x1xf32> to vector<16x128xf32>
    %289 = arith.mulf %279, %288 : vector<16x128xf32>
    %290 = arith.truncf %289 : vector<16x128xf32> to vector<16x128xbf16>
    %c0_116 = arith.constant 0 : index
    %c0_117 = arith.constant 0 : index
    %291 = vector.load %arg3[%c0_116, %c0_117] : memref<128x384xbf16, #tpu.memory_space<vmem>>, vector<128x384xbf16>
    %cst_118 = arith.constant dense<0.000000e+00> : vector<16x384xf32>
    %292 = tpu.matmul %290, %291, %cst_118 {dimension_numbers = #tpu.dot_dimension_numbers<[1], [0], [0], [1], [0, 0, 1, 1], [], []>} : vector<16x128xbf16>, vector<128x384xbf16>, vector<16x384xf32> -> vector<16x384xf32>
    %c0_119 = arith.constant 0 : index
    %c0_120 = arith.constant 0 : index
    %293 = vector.load %arg4[%c0_119, %c0_120] : memref<1x384xf32, #tpu.memory_space<vmem>>, vector<1x384xf32>
    %294 = vector.broadcast %293 : vector<1x384xf32> to vector<16x384xf32>
    %295 = arith.addf %292, %294 : vector<16x384xf32>
    %296 = vector.extract_strided_slice %295 {offsets = [0, 0], sizes = [16, 128], strides = [1, 1]} : vector<16x384xf32> to vector<16x128xf32>
    %297 = vector.extract_strided_slice %295 {offsets = [0, 128], sizes = [16, 128], strides = [1, 1]} : vector<16x384xf32> to vector<16x128xf32>
    %298 = vector.extract_strided_slice %295 {offsets = [0, 256], sizes = [16, 128], strides = [1, 1]} : vector<16x384xf32> to vector<16x128xf32>
    %299 = arith.truncf %296 : vector<16x128xf32> to vector<16x128xbf16>
    %300 = arith.truncf %297 : vector<16x128xf32> to vector<16x128xbf16>
    %cst_121 = arith.constant dense<0.000000e+00> : vector<16x16xf32>
    %301 = tpu.matmul %299, %300, %cst_121 {dimension_numbers = #tpu.dot_dimension_numbers<[1], [1], [0], [0], [0, 0, 1, 0], [], []>} : vector<16x128xbf16>, vector<16x128xbf16>, vector<16x16xf32> -> vector<16x16xf32>
    %cst_122 = arith.constant dense<0xFF800000> : vector<16xf32>
    %302 = vector.multi_reduction <maximumf>, %301, %cst_122 [1] : vector<16x16xf32> to vector<16xf32>
    %303 = vector.shape_cast %302 : vector<16xf32> to vector<16x1xf32>
    %304 = vector.broadcast %303 : vector<16x1xf32> to vector<16x16xf32>
    %305 = arith.subf %301, %304 : vector<16x16xf32>
    %306 = math.exp %305 : vector<16x16xf32>
    %cst_123 = arith.constant dense<0.000000e+00> : vector<16xf32>
    %307 = vector.multi_reduction <add>, %306, %cst_123 [1] : vector<16x16xf32> to vector<16xf32>
    %308 = vector.shape_cast %307 : vector<16xf32> to vector<16x1xf32>
    %309 = tpu.reciprocal %308 {approx = true} : vector<16x1xf32> -> vector<16x1xf32>
    %310 = vector.broadcast %309 : vector<16x1xf32> to vector<16x16xf32>
    %311 = arith.mulf %306, %310 : vector<16x16xf32>
    %312 = arith.truncf %311 : vector<16x16xf32> to vector<16x16xbf16>
    %313 = arith.truncf %298 : vector<16x128xf32> to vector<16x128xbf16>
    %cst_124 = arith.constant dense<0.000000e+00> : vector<16x128xf32>
    %314 = tpu.matmul %312, %313, %cst_124 {dimension_numbers = #tpu.dot_dimension_numbers<[1], [0], [0], [1], [0, 0, 1, 1], [], []>} : vector<16x16xbf16>, vector<16x128xbf16>, vector<16x128xf32> -> vector<16x128xf32>
    %315 = arith.addf %314, %273 : vector<16x128xf32>
    %cst_125 = arith.constant dense<0.000000e+00> : vector<16xf32>
    %316 = vector.multi_reduction <add>, %315, %cst_125 [1] : vector<16x128xf32> to vector<16xf32>
    %317 = vector.shape_cast %316 : vector<16xf32> to vector<16x1xf32>
    %cst_126 = arith.constant 1.280000e+02 : f32
    %318 = vector.broadcast %cst_126 : f32 to vector<16x1xf32>
    %319 = arith.divf %317, %318 : vector<16x1xf32>
    %320 = vector.broadcast %319 : vector<16x1xf32> to vector<16x128xf32>
    %321 = arith.subf %315, %320 : vector<16x128xf32>
    %322 = arith.mulf %321, %321 : vector<16x128xf32>
    %cst_127 = arith.constant dense<0.000000e+00> : vector<16xf32>
    %323 = vector.multi_reduction <add>, %322, %cst_127 [1] : vector<16x128xf32> to vector<16xf32>
    %324 = vector.shape_cast %323 : vector<16xf32> to vector<16x1xf32>
    %cst_128 = arith.constant 1.280000e+02 : f32
    %325 = vector.broadcast %cst_128 : f32 to vector<16x1xf32>
    %326 = arith.divf %324, %325 : vector<16x1xf32>
    %cst_129 = arith.constant 9.99999974E-6 : f32
    %327 = vector.broadcast %cst_129 : f32 to vector<16x1xf32>
    %328 = arith.addf %326, %327 : vector<16x1xf32>
    %329 = math.rsqrt %328 : vector<16x1xf32>
    %330 = vector.broadcast %329 : vector<16x1xf32> to vector<16x128xf32>
    %331 = arith.mulf %321, %330 : vector<16x128xf32>
    %332 = arith.truncf %331 : vector<16x128xf32> to vector<16x128xbf16>
    %c0_130 = arith.constant 0 : index
    %c0_131 = arith.constant 0 : index
    %333 = vector.load %arg5[%c0_130, %c0_131] : memref<128x128xbf16, #tpu.memory_space<vmem>>, vector<128x128xbf16>
    %cst_132 = arith.constant dense<0.000000e+00> : vector<16x128xf32>
    %334 = tpu.matmul %332, %333, %cst_132 {dimension_numbers = #tpu.dot_dimension_numbers<[1], [0], [0], [1], [0, 0, 1, 1], [], []>} : vector<16x128xbf16>, vector<128x128xbf16>, vector<16x128xf32> -> vector<16x128xf32>
    %c0_133 = arith.constant 0 : index
    %c0_134 = arith.constant 0 : index
    %335 = vector.load %arg6[%c0_133, %c0_134] : memref<1x128xf32, #tpu.memory_space<vmem>>, vector<1x128xf32>
    %336 = vector.broadcast %335 : vector<1x128xf32> to vector<16x128xf32>
    %337 = arith.addf %334, %336 : vector<16x128xf32>
    %cst_135 = arith.constant 0.000000e+00 : f32
    %338 = vector.broadcast %cst_135 : f32 to vector<16x128xf32>
    %339 = arith.maximumf %337, %338 : vector<16x128xf32>
    %340 = arith.addf %339, %315 : vector<16x128xf32>
    %c0_136 = arith.constant 0 : index
    %c0_137 = arith.constant 0 : index
    %341 = vector.load %arg7[%c0_136, %c0_137] : memref<16x128xf32, #tpu.memory_space<vmem>>, vector<16x128xf32>
    tpu.vector_store %arg7[%c0_136, %c0_137], %340 {strides = array<i32>} : memref<16x128xf32, #tpu.memory_space<vmem>>, vector<16x128xf32>,
    return
  }
}

</mosaic_0001>

<llo_original>
// kernel: encoder_block_forward.1
$region0: #{encoder_block_forward.1}
  #allocation0 [shape = 'u32[]', space=smem, size = 0x4, offset = 0x4, fixed_abs, tag = 'smem constant byte address 0x4 - core index']
  #allocation1 [shape = 'u32[72,128]{1,0:T(1,128)}', space=vmem, size = 0x9000, scoped, tag = 'internal scratch']
  %s0 = inlined_call_operand.vmem [shape: f32[16,128], index: 0, kind: input, shape index: {}]
  %s1 = inlined_call_operand.hbm [shape: bf16[4,128,896], index: 1, kind: input, shape index: {}]
  %s2 = inlined_call_operand.vmem [shape: f32[4,1,128], index: 2, kind: input, shape index: {}]
  %s3 = inlined_call_operand.hbm [shape: bf16[128,384], index: 3, kind: input, shape index: {}]
  %s4 = inlined_call_operand.vmem [shape: f32[1,384], index: 4, kind: input, shape index: {}]
  %s5 = inlined_call_operand.hbm [shape: bf16[128,128], index: 5, kind: input, shape index: {}]
  %s6 = inlined_call_operand.vmem [shape: f32[1,128], index: 6, kind: input, shape index: {}]
  %s7 = inlined_call_operand.hbm [shape: f32[16,128], index: 7, kind: output, shape index: {}]
  %s8 = sld [smem:[#allocation0]]
  $region50: #{encoder_block_forward.1} parent=0
    _
  %s10 = ssub.s32 1, %s8
  %s11 = scalar_select 0, %s10, %s8
  $region1: #{encoder_block_forward.1} parent=0
    #allocation2 [shape = 'u8[917504]{0}', space=vmem, size = 0xe0000, scoped, tag = 'input window, operand 1, single buffered']
    #allocation3 [shape = 's32[1]{0}', space=sflag, size = 0x4, scoped, tag = 'scoped memory for encoder_block_forward.1']
    #allocation4 [shape = 's32[1]{0}', space=sflag, size = 0x4, scoped, tag = 'scoped memory for encoder_block_forward.1']
    #allocation5 [shape = 'u8[98304]{0}', space=vmem, size = 0x18000, scoped, tag = 'input window, operand 3, single buffered']
    #allocation6 [shape = 's32[1]{0}', space=sflag, size = 0x4, scoped, tag = 'scoped memory for encoder_block_forward.1']
    #allocation7 [shape = 'u8[32768]{0}', space=vmem, size = 0x8000, scoped, tag = 'input window, operand 5, single buffered']
    #allocation8 [shape = 'u8[8192]{0}', space=vmem, size = 0x2000, scoped, tag = 'output window, operand 0, single buffered']
    %12 = vsyncpa [#allocation3], 0
    %13 = vsyncpa [#allocation6], 0
    %14 = vsyncpa [#allocation4], 0
    // Predicated region
    $region2: #{encoder_block_forward.1} parent=1 // pred_check
      _
    $region3: #{encoder_block_forward.1} parent=1 // pred_check_branch
      %16 = sbr.rel (0) target = $region5
    $region4: #{encoder_block_forward.1} parent=1 // pred_region
      _
    $region5: #{encoder_block_forward.1} parent=1 // pred_fallthru
      _
    // Predicated region
    $region6: #{encoder_block_forward.1} parent=1 // pred_check
      _
    $region7: #{encoder_block_forward.1} parent=1 // pred_check_branch
      %18 = sbr.rel (0) target = $region9
    $region8: #{encoder_block_forward.1} parent=1 // pred_region
      %20 = vsyncadd [#allocation3], 0
      %s21 = sshll.u32 %s1, 4
      %s22 = int_to_ptr.hbm [resolvable:$true] %s21
      %s23 = sshll.u32 [#allocation2], 4
      %s24 = int_to_ptr.vmem [resolvable:$true] %s23
      %29 = dma.hbm_to_vmem [thread:$0]  %s22, 28672, %s24, [#allocation3], 448, 448, 28
    $region9: #{encoder_block_forward.1} parent=1 // pred_fallthru
      _
    // Predicated region
    $region10: #{encoder_block_forward.1} parent=1 // pred_check
      _
    $region11: #{encoder_block_forward.1} parent=1 // pred_check_branch
      %31 = sbr.rel (0) target = $region13
    $region12: #{encoder_block_forward.1} parent=1 // pred_region
      _
    $region13: #{encoder_block_forward.1} parent=1 // pred_fallthru
      _
    // Predicated region
    $region14: #{encoder_block_forward.1} parent=1 // pred_check
      _
    $region15: #{encoder_block_forward.1} parent=1 // pred_check_branch
      %33 = sbr.rel (0) target = $region17
    $region16: #{encoder_block_forward.1} parent=1 // pred_region
      %35 = vsyncadd [#allocation6], 0
      %s36 = sshll.u32 %s3, 4
      %s37 = int_to_ptr.hbm [resolvable:$true] %s36
      %s38 = sshll.u32 [#allocation5], 4
      %s39 = int_to_ptr.vmem [resolvable:$true] %s38
      %44 = dma.hbm_to_vmem [thread:$0]  %s37, 3072, %s39, [#allocation6], 192, 192, 12
    $region17: #{encoder_block_forward.1} parent=1 // pred_fallthru
      _
    // Predicated region
    $region18: #{encoder_block_forward.1} parent=1 // pred_check
      _
    $region19: #{encoder_block_forward.1} parent=1 // pred_check_branch
      %46 = sbr.rel (0) target = $region21
    $region20: #{encoder_block_forward.1} parent=1 // pred_region
      _
    $region21: #{encoder_block_forward.1} parent=1 // pred_fallthru
      _
    // Predicated region
    $region22: #{encoder_block_forward.1} parent=1 // pred_check
      _
    $region23: #{encoder_block_forward.1} parent=1 // pred_check_branch
      %48 = sbr.rel (0) target = $region25
    $region24: #{encoder_block_forward.1} parent=1 // pred_region
      %50 = vsyncadd [#allocation6], 0
      %s51 = sshll.u32 %s5, 4
      %s52 = int_to_ptr.hbm [resolvable:$true] %s51
      %s53 = sshll.u32 [#allocation7], 4
      %s54 = int_to_ptr.vmem [resolvable:$true] %s53
      %59 = dma.hbm_to_vmem [thread:$0]  %s52, 1024, %s54, [#allocation6], 64, 64, 4
    $region25: #{encoder_block_forward.1} parent=1 // pred_fallthru
      _
    // Predicated region
    $region26: #{encoder_block_forward.1} parent=1 // pred_check
      _
    $region27: #{encoder_block_forward.1} parent=1 // pred_check_branch
      %61 = sbr.rel (0) target = $region29
    $region28: #{encoder_block_forward.1} parent=1 // pred_region
      _
    $region29: #{encoder_block_forward.1} parent=1 // pred_fallthru
      _
    // Predicated region
    $region30: #{encoder_block_forward.1} parent=1 // pred_check
      _
    $region31: #{encoder_block_forward.1} parent=1 // pred_check_branch
      %63 = sbr.rel (0) target = $region33
    $region32: #{encoder_block_forward.1} parent=1 // pred_region
      %65 = dma.done [#allocation3], 28672
    $region33: #{encoder_block_forward.1} parent=1 // pred_fallthru
      _
    // Predicated region
    $region34: #{encoder_block_forward.1} parent=1 // pred_check
      _
    $region35: #{encoder_block_forward.1} parent=1 // pred_check_branch
      %67 = sbr.rel (0) target = $region37
    $region36: #{encoder_block_forward.1} parent=1 // pred_region
      %69 = dma.done [#allocation6], 3072
    $region37: #{encoder_block_forward.1} parent=1 // pred_fallthru
      _
    // Predicated region
    $region38: #{encoder_block_forward.1} parent=1 // pred_check
      _
    $region39: #{encoder_block_forward.1} parent=1 // pred_check_branch
      %71 = sbr.rel (0) target = $region41
    $region40: #{encoder_block_forward.1} parent=1 // pred_region
      %73 = dma.done [#allocation6], 1024
    $region41: #{encoder_block_forward.1} parent=1 // pred_fallthru
      _
    %v75 = vlaneseq
    %v76 = vshrl.u32 %v75, 7
    %v77 = vadd.s32 %v76, 8
    %v78 = vld [vmem:[%s0] sm:$0xff]
    %v79 = vld [vmem:[%s0 + $0x8] sm:$0xff]
    %80 = vadd.xlane.f32.xlu0 %v78
    %v81 = vpop.xlane.xlu0 %80
    %82 = vadd.xlane.f32.xlu0 %v79
    %v83 = vpop.xlane.xlu0 %82
    %v84 = vrcp.pop 128.0
    %v85 = vmul.f32 128.0, %v84
    %v86 = vsub.f32 1.0, %v85
    %v87 = vmul.f32 %v84, %v86
    %v88 = vadd.f32 %v84, %v87
    %vm89 = vweird.f32 %v84
    %v90 = vsel %vm89, %v84, %v88
    %v91 = vmul.f32 %v81, %v90
    %v92 = vmul.f32 %v83, %v90
    %v93 = vsub.f32 %v78, %v91
    %v94 = vsub.f32 %v79, %v92
    %v95 = vmul.f32 %v93, %v93
    %v96 = vmul.f32 %v94, %v94
    %97 = vadd.xlane.f32.xlu0 %v95
    %v98 = vpop.xlane.xlu0 %97
    %99 = vadd.xlane.f32.xlu0 %v96
    %v100 = vpop.xlane.xlu0 %99
    %v101 = vmul.f32 %v98, %v90
    %v102 = vmul.f32 %v100, %v90
    %v103 = vadd.f32 %v101, 1e-05
    %v104 = vadd.f32 %v102, 1e-05
    %v105 = vrsqrt.pop %v103
    %v106 = vmul.f32 %v105, %v103
    %v107 = vmul.f32 %v106, %v105
    %v108 = vmul.f32 0.5, %v107
    %v109 = vsub.f32 1.5, %v108
    %v110 = vmul.f32 %v105, %v109
    %vm111 = vweird.f32 %v103
    %vm112 = vweird.f32 %v105
    %vm113 = vmor %vm111, %vm112
    %v114 = vsel %vm113, %v105, %v110
    %v115 = vrsqrt.pop %v104
    %v116 = vmul.f32 %v115, %v104
    %v117 = vmul.f32 %v116, %v115
    %v118 = vmul.f32 0.5, %v117
    %v119 = vsub.f32 1.5, %v118
    %v120 = vmul.f32 %v115, %v119
    %vm121 = vweird.f32 %v104
    %vm122 = vweird.f32 %v115
    %vm123 = vmor %vm121, %vm122
    %v124 = vsel %vm123, %v115, %v120
    %v125 = vmul.f32 %v93, %v114
    %v126 = vmul.f32 %v94, %v124
    %v127 = vpack.c.bf16 %v126, %v125
    %v128 = vld [vmem:[#allocation2] sm:$0xff]
    %v129 = vld [vmem:[#allocation2 + $0x8] sm:$0xff]
    %v130 = vld [vmem:[#allocation2 + $0x10] sm:$0xff]
    %v131 = vld [vmem:[#allocation2 + $0x18] sm:$0xf]
    %v132 = vld [vmem:[#allocation2 + $0x1c] sm:$0xff]
    %v133 = vld [vmem:[#allocation2 + $0x24] sm:$0xff]
    %v134 = vld [vmem:[#allocation2 + $0x2c] sm:$0xff]
    %v135 = vld [vmem:[#allocation2 + $0x34] sm:$0xf]
    %v136 = vld [vmem:[#allocation2 + $0x38] sm:$0xff]
    %v137 = vld [vmem:[#allocation2 + $0x40] sm:$0xff]
    %v138 = vld [vmem:[#allocation2 + $0x48] sm:$0xff]
    %v139 = vld [vmem:[#allocation2 + $0x50] sm:$0xf]
    %v140 = vld [vmem:[#allocation2 + $0x54] sm:$0xff]
    %v141 = vld [vmem:[#allocation2 + $0x5c] sm:$0xff]
    %v142 = vld [vmem:[#allocation2 + $0x64] sm:$0xff]
    %v143 = vld [vmem:[#allocation2 + $0x6c] sm:$0xf]
    %v144 = vld [vmem:[#allocation2 + $0x70] sm:$0xff]
    %v145 = vld [vmem:[#allocation2 + $0x78] sm:$0xff]
    %v146 = vld [vmem:[#allocation2 + $0x80] sm:$0xff]
    %v147 = vld [vmem:[#allocation2 + $0x88] sm:$0xf]
    %v148 = vld [vmem:[#allocation2 + $0x8c] sm:$0xff]
    %v149 = vld [vmem:[#allocation2 + $0x94] sm:$0xff]
    %v150 = vld [vmem:[#allocation2 + $0x9c] sm:$0xff]
    %v151 = vld [vmem:[#allocation2 + $0xa4] sm:$0xf]
    %v152 = vld [vmem:[#allocation2 + $0xa8] sm:$0xff]
    %v153 = vld [vmem:[#allocation2 + $0xb0] sm:$0xff]
    %v154 = vld [vmem:[#allocation2 + $0xb8] sm:$0xff]
    %v155 = vld [vmem:[#allocation2 + $0xc0] sm:$0xf]
    %v156 = vld [vmem:[#allocation2 + $0xc4] sm:$0xff]
    %v157 = vld [vmem:[#allocation2 + $0xcc] sm:$0xff]
    %v158 = vld [vmem:[#allocation2 + $0xd4] sm:$0xff]
    %v159 = vld [vmem:[#allocation2 + $0xdc] sm:$0xf]
    %v160 = vld [vmem:[#allocation2 + $0xe0] sm:$0xff]
    %v161 = vld [vmem:[#allocation2 + $0xe8] sm:$0xff]
    %v162 = vld [vmem:[#allocation2 + $0xf0] sm:$0xff]
    %v163 = vld [vmem:[#allocation2 + $0xf8] sm:$0xf]
    %v164 = vld [vmem:[#allocation2 + $0xfc] sm:$0xff]
    %v165 = vld [vmem:[#allocation2 + $0x104] sm:$0xff]
    %v166 = vld [vmem:[#allocation2 + $0x10c] sm:$0xff]
    %v167 = vld [vmem:[#allocation2 + $0x114] sm:$0xf]
    %v168 = vld [vmem:[#allocation2 + $0x118] sm:$0xff]
    %v169 = vld [vmem:[#allocation2 + $0x120] sm:$0xff]
    %v170 = vld [vmem:[#allocation2 + $0x128] sm:$0xff]
    %v171 = vld [vmem:[#allocation2 + $0x130] sm:$0xf]
    %v172 = vld [vmem:[#allocation2 + $0x134] sm:$0xff]
    %v173 = vld [vmem:[#allocation2 + $0x13c] sm:$0xff]
    %v174 = vld [vmem:[#allocation2 + $0x144] sm:$0xff]
    %v175 = vld [vmem:[#allocation2 + $0x14c] sm:$0xf]
    %v176 = vld [vmem:[#allocation2 + $0x150] sm:$0xff]
    %v177 = vld [vmem:[#allocation2 + $0x158] sm:$0xff]
    %v178 = vld [vmem:[#allocation2 + $0x160] sm:$0xff]
    %v179 = vld [vmem:[#allocation2 + $0x168] sm:$0xf]
    %v180 = vld [vmem:[#allocation2 + $0x16c] sm:$0xff]
    %v181 = vld [vmem:[#allocation2 + $0x174] sm:$0xff]
    %v182 = vld [vmem:[#allocation2 + $0x17c] sm:$0xff]
    %v183 = vld [vmem:[#allocation2 + $0x184] sm:$0xf]
    %v184 = vld [vmem:[#allocation2 + $0x188] sm:$0xff]
    %v185 = vld [vmem:[#allocation2 + $0x190] sm:$0xff]
    %v186 = vld [vmem:[#allocation2 + $0x198] sm:$0xff]
    %v187 = vld [vmem:[#allocation2 + $0x1a0] sm:$0xf]
    %v188 = vld [vmem:[#allocation2 + $0x1a4] sm:$0xff]
    %v189 = vld [vmem:[#allocation2 + $0x1ac] sm:$0xff]
    %v190 = vld [vmem:[#allocation2 + $0x1b4] sm:$0xff]
    %v191 = vld [vmem:[#allocation2 + $0x1bc] sm:$0xf]
    %v256 = vunpack.c.l.b16 %v128
    %v257 = vunpack.c.h.b16 %v128
    %v258 = vunpack.c.l.b16 %v129
    %v259 = vunpack.c.h.b16 %v129
    %v260 = vunpack.c.l.b16 %v130
    %v261 = vunpack.c.h.b16 %v130
    %v262 = vunpack.c.l.b16 %v131
    %v263 = vunpack.c.l.b16 %v132
    %v264 = vunpack.c.h.b16 %v132
    %v265 = vunpack.c.l.b16 %v133
    %v266 = vunpack.c.h.b16 %v133
    %v267 = vunpack.c.l.b16 %v134
    %v268 = vunpack.c.h.b16 %v134
    %v269 = vunpack.c.l.b16 %v135
    %v270 = vunpack.c.l.b16 %v136
    %v271 = vunpack.c.h.b16 %v136
    %v272 = vunpack.c.l.b16 %v137
    %v273 = vunpack.c.h.b16 %v137
    %v274 = vunpack.c.l.b16 %v138
    %v275 = vunpack.c.h.b16 %v138
    %v276 = vunpack.c.l.b16 %v139
    %v277 = vunpack.c.l.b16 %v140
    %v278 = vunpack.c.h.b16 %v140
    %v279 = vunpack.c.l.b16 %v141
    %v280 = vunpack.c.h.b16 %v141
    %v281 = vunpack.c.l.b16 %v142
    %v282 = vunpack.c.h.b16 %v142
    %v283 = vunpack.c.l.b16 %v143
    %v284 = vunpack.c.l.b16 %v144
    %v285 = vunpack.c.h.b16 %v144
    %v286 = vunpack.c.l.b16 %v145
    %v287 = vunpack.c.h.b16 %v145
    %v288 = vunpack.c.l.b16 %v146
    %v289 = vunpack.c.h.b16 %v146
    %v290 = vunpack.c.l.b16 %v147
    %v291 = vunpack.c.l.b16 %v148
    %v292 = vunpack.c.h.b16 %v148
    %v293 = vunpack.c.l.b16 %v149
    %v294 = vunpack.c.h.b16 %v149
    %v295 = vunpack.c.l.b16 %v150
    %v296 = vunpack.c.h.b16 %v150
    %v297 = vunpack.c.l.b16 %v151
    %v298 = vunpack.c.l.b16 %v152
    %v299 = vunpack.c.h.b16 %v152
    %v300 = vunpack.c.l.b16 %v153
    %v301 = vunpack.c.h.b16 %v153
    %v302 = vunpack.c.l.b16 %v154
    %v303 = vunpack.c.h.b16 %v154
    %v304 = vunpack.c.l.b16 %v155
    %v305 = vunpack.c.l.b16 %v156
    %v306 = vunpack.c.h.b16 %v156
    %v307 = vunpack.c.l.b16 %v157
    %v308 = vunpack.c.h.b16 %v157
    %v309 = vunpack.c.l.b16 %v158
    %v310 = vunpack.c.h.b16 %v158
    %v311 = vunpack.c.l.b16 %v159
    %v312 = vunpack.c.l.b16 %v160
    %v313 = vunpack.c.h.b16 %v160
    %v314 = vunpack.c.l.b16 %v161
    %v315 = vunpack.c.h.b16 %v161
    %v316 = vunpack.c.l.b16 %v162
    %v317 = vunpack.c.h.b16 %v162
    %v318 = vunpack.c.l.b16 %v163
    %v319 = vunpack.c.l.b16 %v164
    %v320 = vunpack.c.h.b16 %v164
    %v321 = vunpack.c.l.b16 %v165
    %v322 = vunpack.c.h.b16 %v165
    %v323 = vunpack.c.l.b16 %v166
    %v324 = vunpack.c.h.b16 %v166
    %v325 = vunpack.c.l.b16 %v167
    %v326 = vunpack.c.l.b16 %v168
    %v327 = vunpack.c.h.b16 %v168
    %v328 = vunpack.c.l.b16 %v169
    %v329 = vunpack.c.h.b16 %v169
    %v330 = vunpack.c.l.b16 %v170
    %v331 = vunpack.c.h.b16 %v170
    %v332 = vunpack.c.l.b16 %v171
    %v333 = vunpack.c.l.b16 %v172
    %v334 = vunpack.c.h.b16 %v172
    %v335 = vunpack.c.l.b16 %v173
    %v336 = vunpack.c.h.b16 %v173
    %v337 = vunpack.c.l.b16 %v174
    %v338 = vunpack.c.h.b16 %v174
    %v339 = vunpack.c.l.b16 %v175
    %v340 = vunpack.c.l.b16 %v176
    %v341 = vunpack.c.h.b16 %v176
    %v342 = vunpack.c.l.b16 %v177
    %v343 = vunpack.c.h.b16 %v177
    %v344 = vunpack.c.l.b16 %v178
    %v345 = vunpack.c.h.b16 %v178
    %v346 = vunpack.c.l.b16 %v179
    %v347 = vunpack.c.l.b16 %v180
    %v348 = vunpack.c.h.b16 %v180
    %v349 = vunpack.c.l.b16 %v181
    %v350 = vunpack.c.h.b16 %v181
    %v351 = vunpack.c.l.b16 %v182
    %v352 = vunpack.c.h.b16 %v182
    %v353 = vunpack.c.l.b16 %v183
    %v354 = vunpack.c.l.b16 %v184
    %v355 = vunpack.c.h.b16 %v184
    %v356 = vunpack.c.l.b16 %v185
    %v357 = vunpack.c.h.b16 %v185
    %v358 = vunpack.c.l.b16 %v186
    %v359 = vunpack.c.h.b16 %v186
    %v360 = vunpack.c.l.b16 %v187
    %v361 = vunpack.c.l.b16 %v188
    %v362 = vunpack.c.h.b16 %v188
    %v363 = vunpack.c.l.b16 %v189
    %v364 = vunpack.c.h.b16 %v189
    %v365 = vunpack.c.l.b16 %v190
    %v366 = vunpack.c.h.b16 %v190
    %v367 = vunpack.c.l.b16 %v191
    %v368 = vpack.c.b16 %v263, %v256
    %v369 = vpack.c.b16 %v264, %v257
    %v370 = vpack.c.b16 %v265, %v258
    %v371 = vpack.c.b16 %v266, %v259
    %v372 = vpack.c.b16 %v267, %v260
    %v373 = vpack.c.b16 %v268, %v261
    %v374 = vpack.c.b16 %v269, %v262
    %v375 = vpack.c.b16 %v277, %v270
    %v376 = vpack.c.b16 %v278, %v271
    %v377 = vpack.c.b16 %v279, %v272
    %v378 = vpack.c.b16 %v280, %v273
    %v379 = vpack.c.b16 %v281, %v274
    %v380 = vpack.c.b16 %v282, %v275
    %v381 = vpack.c.b16 %v283, %v276
    %v382 = vpack.c.b16 %v291, %v284
    %v383 = vpack.c.b16 %v292, %v285
    %v384 = vpack.c.b16 %v293, %v286
    %v385 = vpack.c.b16 %v294, %v287
    %v386 = vpack.c.b16 %v295, %v288
    %v387 = vpack.c.b16 %v296, %v289
    %v388 = vpack.c.b16 %v297, %v290
    %v389 = vpack.c.b16 %v305, %v298
    %v390 = vpack.c.b16 %v306, %v299
    %v391 = vpack.c.b16 %v307, %v300
    %v392 = vpack.c.b16 %v308, %v301
    %v393 = vpack.c.b16 %v309, %v302
    %v394 = vpack.c.b16 %v310, %v303
    %v395 = vpack.c.b16 %v311, %v304
    %v396 = vpack.c.b16 %v319, %v312
    %v397 = vpack.c.b16 %v320, %v313
    %v398 = vpack.c.b16 %v321, %v314
    %v399 = vpack.c.b16 %v322, %v315
    %v400 = vpack.c.b16 %v323, %v316
    %v401 = vpack.c.b16 %v324, %v317
    %v402 = vpack.c.b16 %v325, %v318
    %v403 = vpack.c.b16 %v333, %v326
    %v404 = vpack.c.b16 %v334, %v327
    %v405 = vpack.c.b16 %v335, %v328
    %v406 = vpack.c.b16 %v336, %v329
    %v407 = vpack.c.b16 %v337, %v330
    %v408 = vpack.c.b16 %v338, %v331
    %v409 = vpack.c.b16 %v339, %v332
    %v410 = vpack.c.b16 %v347, %v340
    %v411 = vpack.c.b16 %v348, %v341
    %v412 = vpack.c.b16 %v349, %v342
    %v413 = vpack.c.b16 %v350, %v343
    %v414 = vpack.c.b16 %v351, %v344
    %v415 = vpack.c.b16 %v352, %v345
    %v416 = vpack.c.b16 %v353, %v346
    %v417 = vpack.c.b16 %v361, %v354
    %v418 = vpack.c.b16 %v362, %v355
    %v419 = vpack.c.b16 %v363, %v356
    %v420 = vpack.c.b16 %v364, %v357
    %v421 = vpack.c.b16 %v365, %v358
    %v422 = vpack.c.b16 %v366, %v359
    %v423 = vpack.c.b16 %v367, %v360
    %480 = vmatpush.bf16.msra.mxu0 %v417
    %481 = vmatpush.bf16.msra.mxu0 %v410
    %482 = vmatpush.bf16.msra.mxu0 %v403
    %483 = vmatpush.bf16.msra.mxu0 %v396
    %484 = vmatpush.bf16.msra.mxu0 %v389
    %485 = vmatpush.bf16.msra.mxu0 %v382
    %486 = vmatpush.bf16.msra.mxu0 %v375
    %487 = vmatpush.bf16.msra.mxu0 %v368
    %488 = vmatmul.bf16.gmra.mxu0 %v127
    %v489 = vpop.f32.mrf.mxu0
    %v490 = vadd.f32 0.0, %v489
    %v491 = vpop.f32.mrf.mxu0
    %v492 = vadd.f32 0.0, %v491
    %493 = vdwg.mxu0
    %494 = vmatpush.bf16.msra.mxu0 %v418
    %495 = vmatpush.bf16.msra.mxu0 %v411
    %496 = vmatpush.bf16.msra.mxu0 %v404
    %497 = vmatpush.bf16.msra.mxu0 %v397
    %498 = vmatpush.bf16.msra.mxu0 %v390
    %499 = vmatpush.bf16.msra.mxu0 %v383
    %500 = vmatpush.bf16.msra.mxu0 %v376
    %501 = vmatpush.bf16.msra.mxu0 %v369
    %502 = vmatmul.bf16.gmra.mxu0 %v127
    %v503 = vpop.f32.mrf.mxu0
    %v504 = vadd.f32 0.0, %v503
    %v505 = vpop.f32.mrf.mxu0
    %v506 = vadd.f32 0.0, %v505
    %507 = vdwg.mxu0
    %508 = vmatpush.bf16.msra.mxu0 %v419
    %509 = vmatpush.bf16.msra.mxu0 %v412
    %510 = vmatpush.bf16.msra.mxu0 %v405
    %511 = vmatpush.bf16.msra.mxu0 %v398
    %512 = vmatpush.bf16.msra.mxu0 %v391
    %513 = vmatpush.bf16.msra.mxu0 %v384
    %514 = vmatpush.bf16.msra.mxu0 %v377
    %515 = vmatpush.bf16.msra.mxu0 %v370
    %516 = vmatmul.bf16.gmra.mxu0 %v127
    %v517 = vpop.f32.mrf.mxu0
    %v518 = vadd.f32 0.0, %v517
    %v519 = vpop.f32.mrf.mxu0
    %v520 = vadd.f32 0.0, %v519
    %521 = vdwg.mxu0
    %522 = vmatpush.bf16.msra.mxu0 %v420
    %523 = vmatpush.bf16.msra.mxu0 %v413
    %524 = vmatpush.bf16.msra.mxu0 %v406
    %525 = vmatpush.bf16.msra.mxu0 %v399
    %526 = vmatpush.bf16.msra.mxu0 %v392
    %527 = vmatpush.bf16.msra.mxu0 %v385
    %528 = vmatpush.bf16.msra.mxu0 %v378
    %529 = vmatpush.bf16.msra.mxu0 %v371
    %530 = vmatmul.bf16.gmra.mxu0 %v127
    %v531 = vpop.f32.mrf.mxu0
    %v532 = vadd.f32 0.0, %v531
    %v533 = vpop.f32.mrf.mxu0
    %v534 = vadd.f32 0.0, %v533
    %535 = vdwg.mxu0
    %536 = vmatpush.bf16.msra.mxu0 %v421
    %537 = vmatpush.bf16.msra.mxu0 %v414
    %538 = vmatpush.bf16.msra.mxu0 %v407
    %539 = vmatpush.bf16.msra.mxu0 %v400
    %540 = vmatpush.bf16.msra.mxu0 %v393
    %541 = vmatpush.bf16.msra.mxu0 %v386
    %542 = vmatpush.bf16.msra.mxu0 %v379
    %543 = vmatpush.bf16.msra.mxu0 %v372
    %544 = vmatmul.bf16.gmra.mxu0 %v127
    %v545 = vpop.f32.mrf.mxu0
    %v546 = vadd.f32 0.0, %v545
    %v547 = vpop.f32.mrf.mxu0
    %v548 = vadd.f32 0.0, %v547
    %549 = vdwg.mxu0
    %550 = vmatpush.bf16.msra.mxu0 %v422
    %551 = vmatpush.bf16.msra.mxu0 %v415
    %552 = vmatpush.bf16.msra.mxu0 %v408
    %553 = vmatpush.bf16.msra.mxu0 %v401
    %554 = vmatpush.bf16.msra.mxu0 %v394
    %555 = vmatpush.bf16.msra.mxu0 %v387
    %556 = vmatpush.bf16.msra.mxu0 %v380
    %557 = vmatpush.bf16.msra.mxu0 %v373
    %558 = vmatmul.bf16.gmra.mxu0 %v127
    %v559 = vpop.f32.mrf.mxu0
    %v560 = vadd.f32 0.0, %v559
    %v561 = vpop.f32.mrf.mxu0
    %v562 = vadd.f32 0.0, %v561
    %563 = vdwg.mxu0
    %564 = vmatpush.bf16.msra.mxu0 %v423
    %565 = vmatpush.bf16.msra.mxu0 %v416
    %566 = vmatpush.bf16.msra.mxu0 %v409
    %567 = vmatpush.bf16.msra.mxu0 %v402
    %568 = vmatpush.bf16.msra.mxu0 %v395
    %569 = vmatpush.bf16.msra.mxu0 %v388
    %570 = vmatpush.bf16.msra.mxu0 %v381
    %571 = vmatpush.bf16.msra.mxu0 %v374
    %572 = vmatmul.bf16.gmra.mxu0 %v127
    %v573 = vpop.f32.mrf.mxu0
    %v574 = vadd.f32 0.0, %v573
    %v575 = vpop.f32.mrf.mxu0
    %v576 = vadd.f32 0.0, %v575
    %577 = vdwg.mxu0
    %v578 = vrot.slane %v490, 5
    %v579 = vrot.slane %v492, 5
    %vm580 = vcmp.lt.s32.totalorder %v76, 3
    %v581 = vsel %vm580, %v578, %v579
    %v582 = vsel %vm580, %v579, %v578
    %vm583 = vcmp.ge.s32.totalorder %v76, 3
    %vm584 = vcmp.ge.s32.totalorder %v77, 3
    %v585 = vsel %vm583, %v582, 0.0
    %v586 = vsel %vm584, %v581, 0.0
    %v587 = vadd.f32 %v532, %v585
    %v588 = vadd.f32 %v534, %v586
    %v589 = vrot.slane %v504, 6
    %v590 = vrot.slane %v506, 6
    %vm591 = vcmp.lt.s32.totalorder %v76, 2
    %v592 = vsel %vm591, %v589, %v590
    %v593 = vsel %vm591, %v590, %v589
    %vm594 = vcmp.ge.s32.totalorder %v76, 2
    %vm595 = vcmp.ge.s32.totalorder %v77, 2
    %v596 = vsel %vm594, %v593, 0.0
    %v597 = vsel %vm595, %v592, 0.0
    %v598 = vadd.f32 %v587, %v596
    %v599 = vadd.f32 %v588, %v597
    %v600 = vrot.slane %v518, 7
    %v601 = vrot.slane %v520, 7
    %vm602 = vcmp.lt.s32.totalorder %v76, 1
    %v603 = vsel %vm602, %v600, %v601
    %v604 = vsel %vm602, %v601, %v600
    %vm605 = vcmp.ge.s32.totalorder %v76, 1
    %vm606 = vcmp.ge.s32.totalorder %v77, 1
    %v607 = vsel %vm605, %v604, 0.0
    %v608 = vsel %vm606, %v603, 0.0
    %v609 = vadd.f32 %v598, %v607
    %v610 = vadd.f32 %v599, %v608
    %v611 = vrot.slane %v546, 1
    %v612 = vrot.slane %v548, 1
    %vm613 = vcmp.lt.s32.totalorder %v76, 7
    %v614 = vsel %vm613, %v611, %v612
    %v615 = vsel %vm613, %v612, %v611
    %vm616 = vcmp.lt.s32.totalorder %v76, 15
    %vm617 = vcmp.lt.s32.totalorder %v77, 15
    %v618 = vsel %vm616, %v614, 0.0
    %v619 = vsel %vm617, %v615, 0.0
    %v620 = vadd.f32 %v609, %v618
    %v621 = vadd.f32 %v610, %v619
    %v622 = vrot.slane %v560, 2
    %v623 = vrot.slane %v562, 2
    %vm624 = vcmp.lt.s32.totalorder %v76, 6
    %v625 = vsel %vm624, %v622, %v623
    %v626 = vsel %vm624, %v623, %v622
    %vm627 = vcmp.lt.s32.totalorder %v76, 14
    %vm628 = vcmp.lt.s32.totalorder %v77, 14
    %v629 = vsel %vm627, %v625, 0.0
    %v630 = vsel %vm628, %v626, 0.0
    %v631 = vadd.f32 %v620, %v629
    %v632 = vadd.f32 %v621, %v630
    %v633 = vrot.slane %v574, 3
    %v634 = vrot.slane %v576, 3
    %vm635 = vcmp.lt.s32.totalorder %v76, 5
    %v636 = vsel %vm635, %v633, %v634
    %v637 = vsel %vm635, %v634, %v633
    %vm638 = vcmp.lt.s32.totalorder %v76, 13
    %vm639 = vcmp.lt.s32.totalorder %v77, 13
    %v640 = vsel %vm638, %v636, 0.0
    %v641 = vsel %vm639, %v637, 0.0
    %v642 = vadd.f32 %v631, %v640
    %v643 = vadd.f32 %v632, %v641
    %v644 = vld [vmem:[%s2] sm:$0x1]
    %v646 = vperm.slane %v644, 0
    %v648 = vadd.f32 %v642, %v646
    %v649 = vadd.f32 %v643, %v646
    %v650 = vadd.f32 %v648, %v78
    %v651 = vadd.f32 %v649, %v79
    %652 = vadd.xlane.f32.xlu0 %v650
    %v653 = vpop.xlane.xlu0 %652
    %654 = vadd.xlane.f32.xlu0 %v651
    %v655 = vpop.xlane.xlu0 %654
    %v656 = vmul.f32 %v653, %v90
    %v657 = vmul.f32 %v655, %v90
    %v658 = vsub.f32 %v650, %v656
    %v659 = vsub.f32 %v651, %v657
    %v660 = vmul.f32 %v658, %v658
    %v661 = vmul.f32 %v659, %v659
    %662 = vadd.xlane.f32.xlu0 %v660
    %v663 = vpop.xlane.xlu0 %662
    %664 = vadd.xlane.f32.xlu0 %v661
    %v665 = vpop.xlane.xlu0 %664
    %v666 = vmul.f32 %v663, %v90
    %v667 = vmul.f32 %v665, %v90
    %v668 = vadd.f32 %v666, 1e-05
    %v669 = vadd.f32 %v667, 1e-05
    %v670 = vrsqrt.pop %v668
    %v671 = vmul.f32 %v670, %v668
    %v672 = vmul.f32 %v671, %v670
    %v673 = vmul.f32 0.5, %v672
    %v674 = vsub.f32 1.5, %v673
    %v675 = vmul.f32 %v670, %v674
    %vm676 = vweird.f32 %v668
    %vm677 = vweird.f32 %v670
    %vm678 = vmor %vm676, %vm677
    %v679 = vsel %vm678, %v670, %v675
    %v680 = vrsqrt.pop %v669
    %v681 = vmul.f32 %v680, %v669
    %v682 = vmul.f32 %v681, %v680
    %v683 = vmul.f32 0.5, %v682
    %v684 = vsub.f32 1.5, %v683
    %v685 = vmul.f32 %v680, %v684
    %vm686 = vweird.f32 %v669
    %vm687 = vweird.f32 %v680
    %vm688 = vmor %vm686, %vm687
    %v689 = vsel %vm688, %v680, %v685
    %v690 = vmul.f32 %v658, %v679
    %v691 = vmul.f32 %v659, %v689
    %v692 = vpack.c.bf16 %v691, %v690
    %s693 = scalar_lea.vmem [#allocation2], 448
    %v694 = vld [vmem:[%s693] sm:$0xff]
    %v695 = vld [vmem:[%s693 + $0x8] sm:$0xff]
    %v696 = vld [vmem:[%s693 + $0x10] sm:$0xff]
    %v697 = vld [vmem:[%s693 + $0x18] sm:$0xf]
    %v698 = vld [vmem:[%s693 + $0x1c] sm:$0xff]
    %v699 = vld [vmem:[%s693 + $0x24] sm:$0xff]
    %v700 = vld [vmem:[%s693 + $0x2c] sm:$0xff]
    %v701 = vld [vmem:[%s693 + $0x34] sm:$0xf]
    %v702 = vld [vmem:[%s693 + $0x38] sm:$0xff]
    %v703 = vld [vmem:[%s693 + $0x40] sm:$0xff]
    %v704 = vld [vmem:[%s693 + $0x48] sm:$0xff]
    %v705 = vld [vmem:[%s693 + $0x50] sm:$0xf]
    %v706 = vld [vmem:[%s693 + $0x54] sm:$0xff]
    %v707 = vld [vmem:[%s693 + $0x5c] sm:$0xff]
    %v708 = vld [vmem:[%s693 + $0x64] sm:$0xff]
    %v709 = vld [vmem:[%s693 + $0x6c] sm:$0xf]
    %v710 = vld [vmem:[%s693 + $0x70] sm:$0xff]
    %v711 = vld [vmem:[%s693 + $0x78] sm:$0xff]
    %v712 = vld [vmem:[%s693 + $0x80] sm:$0xff]
    %v713 = vld [vmem:[%s693 + $0x88] sm:$0xf]
    %v714 = vld [vmem:[%s693 + $0x8c] sm:$0xff]
    %v715 = vld [vmem:[%s693 + $0x94] sm:$0xff]
    %v716 = vld [vmem:[%s693 + $0x9c] sm:$0xff]
    %v717 = vld [vmem:[%s693 + $0xa4] sm:$0xf]
    %v718 = vld [vmem:[%s693 + $0xa8] sm:$0xff]
    %v719 = vld [vmem:[%s693 + $0xb0] sm:$0xff]
    %v720 = vld [vmem:[%s693 + $0xb8] sm:$0xff]
    %v721 = vld [vmem:[%s693 + $0xc0] sm:$0xf]
    %v722 = vld [vmem:[%s693 + $0xc4] sm:$0xff]
    %v723 = vld [vmem:[%s693 + $0xcc] sm:$0xff]
    %v724 = vld [vmem:[%s693 + $0xd4] sm:$0xff]
    %v725 = vld [vmem:[%s693 + $0xdc] sm:$0xf]
    %v726 = vld [vmem:[%s693 + $0xe0] sm:$0xff]
    %v727 = vld [vmem:[%s693 + $0xe8] sm:$0xff]
    %v728 = vld [vmem:[%s693 + $0xf0] sm:$0xff]
    %v729 = vld [vmem:[%s693 + $0xf8] sm:$0xf]
    %v730 = vld [vmem:[%s693 + $0xfc] sm:$0xff]
    %v731 = vld [vmem:[%s693 + $0x104] sm:$0xff]
    %v732 = vld [vmem:[%s693 + $0x10c] sm:$0xff]
    %v733 = vld [vmem:[%s693 + $0x114] sm:$0xf]
    %v734 = vld [vmem:[%s693 + $0x118] sm:$0xff]
    %v735 = vld [vmem:[%s693 + $0x120] sm:$0xff]
    %v736 = vld [vmem:[%s693 + $0x128] sm:$0xff]
    %v737 = vld [vmem:[%s693 + $0x130] sm:$0xf]
    %v738 = vld [vmem:[%s693 + $0x134] sm:$0xff]
    %v739 = vld [vmem:[%s693 + $0x13c] sm:$0xff]
    %v740 = vld [vmem:[%s693 + $0x144] sm:$0xff]
    %v741 = vld [vmem:[%s693 + $0x14c] sm:$0xf]
    %v742 = vld [vmem:[%s693 + $0x150] sm:$0xff]
    %v743 = vld [vmem:[%s693 + $0x158] sm:$0xff]
    %v744 = vld [vmem:[%s693 + $0x160] sm:$0xff]
    %v745 = vld [vmem:[%s693 + $0x168] sm:$0xf]
    %v746 = vld [vmem:[%s693 + $0x16c] sm:$0xff]
    %v747 = vld [vmem:[%s693 + $0x174] sm:$0xff]
    %v748 = vld [vmem:[%s693 + $0x17c] sm:$0xff]
    %v749 = vld [vmem:[%s693 + $0x184] sm:$0xf]
    %v750 = vld [vmem:[%s693 + $0x188] sm:$0xff]
    %v751 = vld [vmem:[%s693 + $0x190] sm:$0xff]
    %v752 = vld [vmem:[%s693 + $0x198] sm:$0xff]
    %v753 = vld [vmem:[%s693 + $0x1a0] sm:$0xf]
    %v754 = vld [vmem:[%s693 + $0x1a4] sm:$0xff]
    %v755 = vld [vmem:[%s693 + $0x1ac] sm:$0xff]
    %v756 = vld [vmem:[%s693 + $0x1b4] sm:$0xff]
    %v757 = vld [vmem:[%s693 + $0x1bc] sm:$0xf]
    %v822 = vunpack.c.l.b16 %v694
    %v823 = vunpack.c.h.b16 %v694
    %v824 = vunpack.c.l.b16 %v695
    %v825 = vunpack.c.h.b16 %v695
    %v826 = vunpack.c.l.b16 %v696
    %v827 = vunpack.c.h.b16 %v696
    %v828 = vunpack.c.l.b16 %v697
    %v829 = vunpack.c.l.b16 %v698
    %v830 = vunpack.c.h.b16 %v698
    %v831 = vunpack.c.l.b16 %v699
    %v832 = vunpack.c.h.b16 %v699
    %v833 = vunpack.c.l.b16 %v700
    %v834 = vunpack.c.h.b16 %v700
    %v835 = vunpack.c.l.b16 %v701
    %v836 = vunpack.c.l.b16 %v702
    %v837 = vunpack.c.h.b16 %v702
    %v838 = vunpack.c.l.b16 %v703
    %v839 = vunpack.c.h.b16 %v703
    %v840 = vunpack.c.l.b16 %v704
    %v841 = vunpack.c.h.b16 %v704
    %v842 = vunpack.c.l.b16 %v705
    %v843 = vunpack.c.l.b16 %v706
    %v844 = vunpack.c.h.b16 %v706
    %v845 = vunpack.c.l.b16 %v707
    %v846 = vunpack.c.h.b16 %v707
    %v847 = vunpack.c.l.b16 %v708
    %v848 = vunpack.c.h.b16 %v708
    %v849 = vunpack.c.l.b16 %v709
    %v850 = vunpack.c.l.b16 %v710
    %v851 = vunpack.c.h.b16 %v710
    %v852 = vunpack.c.l.b16 %v711
    %v853 = vunpack.c.h.b16 %v711
    %v854 = vunpack.c.l.b16 %v712
    %v855 = vunpack.c.h.b16 %v712
    %v856 = vunpack.c.l.b16 %v713
    %v857 = vunpack.c.l.b16 %v714
    %v858 = vunpack.c.h.b16 %v714
    %v859 = vunpack.c.l.b16 %v715
    %v860 = vunpack.c.h.b16 %v715
    %v861 = vunpack.c.l.b16 %v716
    %v862 = vunpack.c.h.b16 %v716
    %v863 = vunpack.c.l.b16 %v717
    %v864 = vunpack.c.l.b16 %v718
    %v865 = vunpack.c.h.b16 %v718
    %v866 = vunpack.c.l.b16 %v719
    %v867 = vunpack.c.h.b16 %v719
    %v868 = vunpack.c.l.b16 %v720
    %v869 = vunpack.c.h.b16 %v720
    %v870 = vunpack.c.l.b16 %v721
    %v871 = vunpack.c.l.b16 %v722
    %v872 = vunpack.c.h.b16 %v722
    %v873 = vunpack.c.l.b16 %v723
    %v874 = vunpack.c.h.b16 %v723
    %v875 = vunpack.c.l.b16 %v724
    %v876 = vunpack.c.h.b16 %v724
    %v877 = vunpack.c.l.b16 %v725
    %v878 = vunpack.c.l.b16 %v726
    %v879 = vunpack.c.h.b16 %v726
    %v880 = vunpack.c.l.b16 %v727
    %v881 = vunpack.c.h.b16 %v727
    %v882 = vunpack.c.l.b16 %v728
    %v883 = vunpack.c.h.b16 %v728
    %v884 = vunpack.c.l.b16 %v729
    %v885 = vunpack.c.l.b16 %v730
    %v886 = vunpack.c.h.b16 %v730
    %v887 = vunpack.c.l.b16 %v731
    %v888 = vunpack.c.h.b16 %v731
    %v889 = vunpack.c.l.b16 %v732
    %v890 = vunpack.c.h.b16 %v732
    %v891 = vunpack.c.l.b16 %v733
    %v892 = vunpack.c.l.b16 %v734
    %v893 = vunpack.c.h.b16 %v734
    %v894 = vunpack.c.l.b16 %v735
    %v895 = vunpack.c.h.b16 %v735
    %v896 = vunpack.c.l.b16 %v736
    %v897 = vunpack.c.h.b16 %v736
    %v898 = vunpack.c.l.b16 %v737
    %v899 = vunpack.c.l.b16 %v738
    %v900 = vunpack.c.h.b16 %v738
    %v901 = vunpack.c.l.b16 %v739
    %v902 = vunpack.c.h.b16 %v739
    %v903 = vunpack.c.l.b16 %v740
    %v904 = vunpack.c.h.b16 %v740
    %v905 = vunpack.c.l.b16 %v741
    %v906 = vunpack.c.l.b16 %v742
    %v907 = vunpack.c.h.b16 %v742
    %v908 = vunpack.c.l.b16 %v743
    %v909 = vunpack.c.h.b16 %v743
    %v910 = vunpack.c.l.b16 %v744
    %v911 = vunpack.c.h.b16 %v744
    %v912 = vunpack.c.l.b16 %v745
    %v913 = vunpack.c.l.b16 %v746
    %v914 = vunpack.c.h.b16 %v746
    %v915 = vunpack.c.l.b16 %v747
    %v916 = vunpack.c.h.b16 %v747
    %v917 = vunpack.c.l.b16 %v748
    %v918 = vunpack.c.h.b16 %v748
    %v919 = vunpack.c.l.b16 %v749
    %v920 = vunpack.c.l.b16 %v750
    %v921 = vunpack.c.h.b16 %v750
    %v922 = vunpack.c.l.b16 %v751
    %v923 = vunpack.c.h.b16 %v751
    %v924 = vunpack.c.l.b16 %v752
    %v925 = vunpack.c.h.b16 %v752
    %v926 = vunpack.c.l.b16 %v753
    %v927 = vunpack.c.l.b16 %v754
    %v928 = vunpack.c.h.b16 %v754
    %v929 = vunpack.c.l.b16 %v755
    %v930 = vunpack.c.h.b16 %v755
    %v931 = vunpack.c.l.b16 %v756
    %v932 = vunpack.c.h.b16 %v756
    %v933 = vunpack.c.l.b16 %v757
    %v934 = vpack.c.b16 %v829, %v822
    %v935 = vpack.c.b16 %v830, %v823
    %v936 = vpack.c.b16 %v831, %v824
    %v937 = vpack.c.b16 %v832, %v825
    %v938 = vpack.c.b16 %v833, %v826
    %v939 = vpack.c.b16 %v834, %v827
    %v940 = vpack.c.b16 %v835, %v828
    %v941 = vpack.c.b16 %v843, %v836
    %v942 = vpack.c.b16 %v844, %v837
    %v943 = vpack.c.b16 %v845, %v838
    %v944 = vpack.c.b16 %v846, %v839
    %v945 = vpack.c.b16 %v847, %v840
    %v946 = vpack.c.b16 %v848, %v841
    %v947 = vpack.c.b16 %v849, %v842
    %v948 = vpack.c.b16 %v857, %v850
    %v949 = vpack.c.b16 %v858, %v851
    %v950 = vpack.c.b16 %v859, %v852
    %v951 = vpack.c.b16 %v860, %v853
    %v952 = vpack.c.b16 %v861, %v854
    %v953 = vpack.c.b16 %v862, %v855
    %v954 = vpack.c.b16 %v863, %v856
    %v955 = vpack.c.b16 %v871, %v864
    %v956 = vpack.c.b16 %v872, %v865
    %v957 = vpack.c.b16 %v873, %v866
    %v958 = vpack.c.b16 %v874, %v867
    %v959 = vpack.c.b16 %v875, %v868
    %v960 = vpack.c.b16 %v876, %v869
    %v961 = vpack.c.b16 %v877, %v870
    %v962 = vpack.c.b16 %v885, %v878
    %v963 = vpack.c.b16 %v886, %v879
    %v964 = vpack.c.b16 %v887, %v880
    %v965 = vpack.c.b16 %v888, %v881
    %v966 = vpack.c.b16 %v889, %v882
    %v967 = vpack.c.b16 %v890, %v883
    %v968 = vpack.c.b16 %v891, %v884
    %v969 = vpack.c.b16 %v899, %v892
    %v970 = vpack.c.b16 %v900, %v893
    %v971 = vpack.c.b16 %v901, %v894
    %v972 = vpack.c.b16 %v902, %v895
    %v973 = vpack.c.b16 %v903, %v896
    %v974 = vpack.c.b16 %v904, %v897
    %v975 = vpack.c.b16 %v905, %v898
    %v976 = vpack.c.b16 %v913, %v906
    %v977 = vpack.c.b16 %v914, %v907
    %v978 = vpack.c.b16 %v915, %v908
    %v979 = vpack.c.b16 %v916, %v909
    %v980 = vpack.c.b16 %v917, %v910
    %v981 = vpack.c.b16 %v918, %v911
    %v982 = vpack.c.b16 %v919, %v912
    %v983 = vpack.c.b16 %v927, %v920
    %v984 = vpack.c.b16 %v928, %v921
    %v985 = vpack.c.b16 %v929, %v922
    %v986 = vpack.c.b16 %v930, %v923
    %v987 = vpack.c.b16 %v931, %v924
    %v988 = vpack.c.b16 %v932, %v925
    %v989 = vpack.c.b16 %v933, %v926
    %1046 = vmatpush.bf16.msra.mxu0 %v983
    %1047 = vmatpush.bf16.msra.mxu0 %v976
    %1048 = vmatpush.bf16.msra.mxu0 %v969
    %1049 = vmatpush.bf16.msra.mxu0 %v962
    %1050 = vmatpush.bf16.msra.mxu0 %v955
    %1051 = vmatpush.bf16.msra.mxu0 %v948
    %1052 = vmatpush.bf16.msra.mxu0 %v941
    %1053 = vmatpush.bf16.msra.mxu0 %v934
    %1054 = vmatmul.bf16.gmra.mxu0 %v692
    %v1055 = vpop.f32.mrf.mxu0
    %v1056 = vadd.f32 0.0, %v1055
    %v1057 = vpop.f32.mrf.mxu0
    %v1058 = vadd.f32 0.0, %v1057
    %1059 = vdwg.mxu0
    %1060 = vmatpush.bf16.msra.mxu0 %v984
    %1061 = vmatpush.bf16.msra.mxu0 %v977
    %1062 = vmatpush.bf16.msra.mxu0 %v970
    %1063 = vmatpush.bf16.msra.mxu0 %v963
    %1064 = vmatpush.bf16.msra.mxu0 %v956
    %1065 = vmatpush.bf16.msra.mxu0 %v949
    %1066 = vmatpush.bf16.msra.mxu0 %v942
    %1067 = vmatpush.bf16.msra.mxu0 %v935
    %1068 = vmatmul.bf16.gmra.mxu0 %v692
    %v1069 = vpop.f32.mrf.mxu0
    %v1070 = vadd.f32 0.0, %v1069
    %v1071 = vpop.f32.mrf.mxu0
    %v1072 = vadd.f32 0.0, %v1071
    %1073 = vdwg.mxu0
    %1074 = vmatpush.bf16.msra.mxu0 %v985
    %1075 = vmatpush.bf16.msra.mxu0 %v978
    %1076 = vmatpush.bf16.msra.mxu0 %v971
    %1077 = vmatpush.bf16.msra.mxu0 %v964
    %1078 = vmatpush.bf16.msra.mxu0 %v957
    %1079 = vmatpush.bf16.msra.mxu0 %v950
    %1080 = vmatpush.bf16.msra.mxu0 %v943
    %1081 = vmatpush.bf16.msra.mxu0 %v936
    %1082 = vmatmul.bf16.gmra.mxu0 %v692
    %v1083 = vpop.f32.mrf.mxu0
    %v1084 = vadd.f32 0.0, %v1083
    %v1085 = vpop.f32.mrf.mxu0
    %v1086 = vadd.f32 0.0, %v1085
    %1087 = vdwg.mxu0
    %1088 = vmatpush.bf16.msra.mxu0 %v986
    %1089 = vmatpush.bf16.msra.mxu0 %v979
    %1090 = vmatpush.bf16.msra.mxu0 %v972
    %1091 = vmatpush.bf16.msra.mxu0 %v965
    %1092 = vmatpush.bf16.msra.mxu0 %v958
    %1093 = vmatpush.bf16.msra.mxu0 %v951
    %1094 = vmatpush.bf16.msra.mxu0 %v944
    %1095 = vmatpush.bf16.msra.mxu0 %v937
    %1096 = vmatmul.bf16.gmra.mxu0 %v692
    %v1097 = vpop.f32.mrf.mxu0
    %v1098 = vadd.f32 0.0, %v1097
    %v1099 = vpop.f32.mrf.mxu0
    %v1100 = vadd.f32 0.0, %v1099
    %1101 = vdwg.mxu0
    %1102 = vmatpush.bf16.msra.mxu0 %v987
    %1103 = vmatpush.bf16.msra.mxu0 %v980
    %1104 = vmatpush.bf16.msra.mxu0 %v973
    %1105 = vmatpush.bf16.msra.mxu0 %v966
    %1106 = vmatpush.bf16.msra.mxu0 %v959
    %1107 = vmatpush.bf16.msra.mxu0 %v952
    %1108 = vmatpush.bf16.msra.mxu0 %v945
    %1109 = vmatpush.bf16.msra.mxu0 %v938
    %1110 = vmatmul.bf16.gmra.mxu0 %v692
    %v1111 = vpop.f32.mrf.mxu0
    %v1112 = vadd.f32 0.0, %v1111
    %v1113 = vpop.f32.mrf.mxu0
    %v1114 = vadd.f32 0.0, %v1113
    %1115 = vdwg.mxu0
    %1116 = vmatpush.bf16.msra.mxu0 %v988
    %1117 = vmatpush.bf16.msra.mxu0 %v981
    %1118 = vmatpush.bf16.msra.mxu0 %v974
    %1119 = vmatpush.bf16.msra.mxu0 %v967
    %1120 = vmatpush.bf16.msra.mxu0 %v960
    %1121 = vmatpush.bf16.msra.mxu0 %v953
    %1122 = vmatpush.bf16.msra.mxu0 %v946
    %1123 = vmatpush.bf16.msra.mxu0 %v939
    %1124 = vmatmul.bf16.gmra.mxu0 %v692
    %v1125 = vpop.f32.mrf.mxu0
    %v1126 = vadd.f32 0.0, %v1125
    %v1127 = vpop.f32.mrf.mxu0
    %v1128 = vadd.f32 0.0, %v1127
    %1129 = vdwg.mxu0
    %1130 = vmatpush.bf16.msra.mxu0 %v989
    %1131 = vmatpush.bf16.msra.mxu0 %v982
    %1132 = vmatpush.bf16.msra.mxu0 %v975
    %1133 = vmatpush.bf16.msra.mxu0 %v968
    %1134 = vmatpush.bf16.msra.mxu0 %v961
    %1135 = vmatpush.bf16.msra.mxu0 %v954
    %1136 = vmatpush.bf16.msra.mxu0 %v947
    %1137 = vmatpush.bf16.msra.mxu0 %v940
    %1138 = vmatmul.bf16.gmra.mxu0 %v692
    %v1139 = vpop.f32.mrf.mxu0
    %v1140 = vadd.f32 0.0, %v1139
    %v1141 = vpop.f32.mrf.mxu0
    %v1142 = vadd.f32 0.0, %v1141
    %1143 = vdwg.mxu0
    %v1144 = vrot.slane %v1056, 5
    %v1145 = vrot.slane %v1058, 5
    %v1146 = vsel %vm580, %v1144, %v1145
    %v1147 = vsel %vm580, %v1145, %v1144
    %v1148 = vsel %vm583, %v1147, 0.0
    %v1149 = vsel %vm584, %v1146, 0.0
    %v1150 = vadd.f32 %v1098, %v1148
    %v1151 = vadd.f32 %v1100, %v1149
    %v1152 = vrot.slane %v1070, 6
    %v1153 = vrot.slane %v1072, 6
    %v1154 = vsel %vm591, %v1152, %v1153
    %v1155 = vsel %vm591, %v1153, %v1152
    %v1156 = vsel %vm594, %v1155, 0.0
    %v1157 = vsel %vm595, %v1154, 0.0
    %v1158 = vadd.f32 %v1150, %v1156
    %v1159 = vadd.f32 %v1151, %v1157
    %v1160 = vrot.slane %v1084, 7
    %v1161 = vrot.slane %v1086, 7
    %v1162 = vsel %vm602, %v1160, %v1161
    %v1163 = vsel %vm602, %v1161, %v1160
    %v1164 = vsel %vm605, %v1163, 0.0
    %v1165 = vsel %vm606, %v1162, 0.0
    %v1166 = vadd.f32 %v1158, %v1164
    %v1167 = vadd.f32 %v1159, %v1165
    %v1168 = vrot.slane %v1112, 1
    %v1169 = vrot.slane %v1114, 1
    %v1170 = vsel %vm613, %v1168, %v1169
    %v1171 = vsel %vm613, %v1169, %v1168
    %v1172 = vsel %vm616, %v1170, 0.0
    %v1173 = vsel %vm617, %v1171, 0.0
    %v1174 = vadd.f32 %v1166, %v1172
    %v1175 = vadd.f32 %v1167, %v1173
    %v1176 = vrot.slane %v1126, 2
    %v1177 = vrot.slane %v1128, 2
    %v1178 = vsel %vm624, %v1176, %v1177
    %v1179 = vsel %vm624, %v1177, %v1176
    %v1180 = vsel %vm627, %v1178, 0.0
    %v1181 = vsel %vm628, %v1179, 0.0
    %v1182 = vadd.f32 %v1174, %v1180
    %v1183 = vadd.f32 %v1175, %v1181
    %v1184 = vrot.slane %v1140, 3
    %v1185 = vrot.slane %v1142, 3
    %v1186 = vsel %vm635, %v1184, %v1185
    %v1187 = vsel %vm635, %v1185, %v1184
    %v1188 = vsel %vm638, %v1186, 0.0
    %v1189 = vsel %vm639, %v1187, 0.0
    %v1190 = vadd.f32 %v1182, %v1188
    %v1191 = vadd.f32 %v1183, %v1189
    %s1192 = scalar_lea.vmem %s2, 1
    %v1193 = vld [vmem:[%s1192] sm:$0x1]
    %v1195 = vperm.slane %v1193, 0
    %v1197 = vadd.f32 %v1190, %v1195
    %v1198 = vadd.f32 %v1191, %v1195
    %v1199 = vadd.f32 %v1197, %v650
    %v1200 = vadd.f32 %v1198, %v651
    %1201 = vadd.xlane.f32.xlu0 %v1199
    %v1202 = vpop.xlane.xlu0 %1201
    %1203 = vadd.xlane.f32.xlu0 %v1200
    %v1204 = vpop.xlane.xlu0 %1203
    %v1205 = vmul.f32 %v1202, %v90
    %v1206 = vmul.f32 %v1204, %v90
    %v1207 = vsub.f32 %v1199, %v1205
    %v1208 = vsub.f32 %v1200, %v1206
    %v1209 = vmul.f32 %v1207, %v1207
    %v1210 = vmul.f32 %v1208, %v1208
    %1211 = vadd.xlane.f32.xlu0 %v1209
    %v1212 = vpop.xlane.xlu0 %1211
    %1213 = vadd.xlane.f32.xlu0 %v1210
    %v1214 = vpop.xlane.xlu0 %1213
    %v1215 = vmul.f32 %v1212, %v90
    %v1216 = vmul.f32 %v1214, %v90
    %v1217 = vadd.f32 %v1215, 1e-05
    %v1218 = vadd.f32 %v1216, 1e-05
    %v1219 = vrsqrt.pop %v1217
    %v1220 = vmul.f32 %v1219, %v1217
    %v1221 = vmul.f32 %v1220, %v1219
    %v1222 = vmul.f32 0.5, %v1221
    %v1223 = vsub.f32 1.5, %v1222
    %v1224 = vmul.f32 %v1219, %v1223
    %vm1225 = vweird.f32 %v1217
    %vm1226 = vweird.f32 %v1219
    %vm1227 = vmor %vm1225, %vm1226
    %v1228 = vsel %vm1227, %v1219, %v1224
    %v1229 = vrsqrt.pop %v1218
    %v1230 = vmul.f32 %v1229, %v1218
    %v1231 = vmul.f32 %v1230, %v1229
    %v1232 = vmul.f32 0.5, %v1231
    %v1233 = vsub.f32 1.5, %v1232
    %v1234 = vmul.f32 %v1229, %v1233
    %vm1235 = vweird.f32 %v1218
    %vm1236 = vweird.f32 %v1229
    %vm1237 = vmor %vm1235, %vm1236
    %v1238 = vsel %vm1237, %v1229, %v1234
    %v1239 = vmul.f32 %v1207, %v1228
    %v1240 = vmul.f32 %v1208, %v1238
    %v1241 = vpack.c.bf16 %v1240, %v1239
    %s1242 = scalar_lea.vmem [#allocation2], 896
    %v1243 = vld [vmem:[%s1242] sm:$0xff]
    %v1244 = vld [vmem:[%s1242 + $0x8] sm:$0xff]
    %v1245 = vld [vmem:[%s1242 + $0x10] sm:$0xff]
    %v1246 = vld [vmem:[%s1242 + $0x18] sm:$0xf]
    %v1247 = vld [vmem:[%s1242 + $0x1c] sm:$0xff]
    %v1248 = vld [vmem:[%s1242 + $0x24] sm:$0xff]
    %v1249 = vld [vmem:[%s1242 + $0x2c] sm:$0xff]
    %v1250 = vld [vmem:[%s1242 + $0x34] sm:$0xf]
    %v1251 = vld [vmem:[%s1242 + $0x38] sm:$0xff]
    %v1252 = vld [vmem:[%s1242 + $0x40] sm:$0xff]
    %v1253 = vld [vmem:[%s1242 + $0x48] sm:$0xff]
    %v1254 = vld [vmem:[%s1242 + $0x50] sm:$0xf]
    %v1255 = vld [vmem:[%s1242 + $0x54] sm:$0xff]
    %v1256 = vld [vmem:[%s1242 + $0x5c] sm:$0xff]
    %v1257 = vld [vmem:[%s1242 + $0x64] sm:$0xff]
    %v1258 = vld [vmem:[%s1242 + $0x6c] sm:$0xf]
    %v1259 = vld [vmem:[%s1242 + $0x70] sm:$0xff]
    %v1260 = vld [vmem:[%s1242 + $0x78] sm:$0xff]
    %v1261 = vld [vmem:[%s1242 + $0x80] sm:$0xff]
    %v1262 = vld [vmem:[%s1242 + $0x88] sm:$0xf]
    %v1263 = vld [vmem:[%s1242 + $0x8c] sm:$0xff]
    %v1264 = vld [vmem:[%s1242 + $0x94] sm:$0xff]
    %v1265 = vld [vmem:[%s1242 + $0x9c] sm:$0xff]
    %v1266 = vld [vmem:[%s1242 + $0xa4] sm:$0xf]
    %v1267 = vld [vmem:[%s1242 + $0xa8] sm:$0xff]
    %v1268 = vld [vmem:[%s1242 + $0xb0] sm:$0xff]
    %v1269 = vld [vmem:[%s1242 + $0xb8] sm:$0xff]
    %v1270 = vld [vmem:[%s1242 + $0xc0] sm:$0xf]
    %v1271 = vld [vmem:[%s1242 + $0xc4] sm:$0xff]
    %v1272 = vld [vmem:[%s1242 + $0xcc] sm:$0xff]
    %v1273 = vld [vmem:[%s1242 + $0xd4] sm:$0xff]
    %v1274 = vld [vmem:[%s1242 + $0xdc] sm:$0xf]
    %v1275 = vld [vmem:[%s1242 + $0xe0] sm:$0xff]
    %v1276 = vld [vmem:[%s1242 + $0xe8] sm:$0xff]
    %v1277 = vld [vmem:[%s1242 + $0xf0] sm:$0xff]
    %v1278 = vld [vmem:[%s1242 + $0xf8] sm:$0xf]
    %v1279 = vld [vmem:[%s1242 + $0xfc] sm:$0xff]
    %v1280 = vld [vmem:[%s1242 + $0x104] sm:$0xff]
    %v1281 = vld [vmem:[%s1242 + $0x10c] sm:$0xff]
    %v1282 = vld [vmem:[%s1242 + $0x114] sm:$0xf]
    %v1283 = vld [vmem:[%s1242 + $0x118] sm:$0xff]
    %v1284 = vld [vmem:[%s1242 + $0x120] sm:$0xff]
    %v1285 = vld [vmem:[%s1242 + $0x128] sm:$0xff]
    %v1286 = vld [vmem:[%s1242 + $0x130] sm:$0xf]
    %v1287 = vld [vmem:[%s1242 + $0x134] sm:$0xff]
    %v1288 = vld [vmem:[%s1242 + $0x13c] sm:$0xff]
    %v1289 = vld [vmem:[%s1242 + $0x144] sm:$0xff]
    %v1290 = vld [vmem:[%s1242 + $0x14c] sm:$0xf]
    %v1291 = vld [vmem:[%s1242 + $0x150] sm:$0xff]
    %v1292 = vld [vmem:[%s1242 + $0x158] sm:$0xff]
    %v1293 = vld [vmem:[%s1242 + $0x160] sm:$0xff]
    %v1294 = vld [vmem:[%s1242 + $0x168] sm:$0xf]
    %v1295 = vld [vmem:[%s1242 + $0x16c] sm:$0xff]
    %v1296 = vld [vmem:[%s1242 + $0x174] sm:$0xff]
    %v1297 = vld [vmem:[%s1242 + $0x17c] sm:$0xff]
    %v1298 = vld [vmem:[%s1242 + $0x184] sm:$0xf]
    %v1299 = vld [vmem:[%s1242 + $0x188] sm:$0xff]
    %v1300 = vld [vmem:[%s1242 + $0x190] sm:$0xff]
    %v1301 = vld [vmem:[%s1242 + $0x198] sm:$0xff]
    %v1302 = vld [vmem:[%s1242 + $0x1a0] sm:$0xf]
    %v1303 = vld [vmem:[%s1242 + $0x1a4] sm:$0xff]
    %v1304 = vld [vmem:[%s1242 + $0x1ac] sm:$0xff]
    %v1305 = vld [vmem:[%s1242 + $0x1b4] sm:$0xff]
    %v1306 = vld [vmem:[%s1242 + $0x1bc] sm:$0xf]
    %v1371 = vunpack.c.l.b16 %v1243
    %v1372 = vunpack.c.h.b16 %v1243
    %v1373 = vunpack.c.l.b16 %v1244
    %v1374 = vunpack.c.h.b16 %v1244
    %v1375 = vunpack.c.l.b16 %v1245
    %v1376 = vunpack.c.h.b16 %v1245
    %v1377 = vunpack.c.l.b16 %v1246
    %v1378 = vunpack.c.l.b16 %v1247
    %v1379 = vunpack.c.h.b16 %v1247
    %v1380 = vunpack.c.l.b16 %v1248
    %v1381 = vunpack.c.h.b16 %v1248
    %v1382 = vunpack.c.l.b16 %v1249
    %v1383 = vunpack.c.h.b16 %v1249
    %v1384 = vunpack.c.l.b16 %v1250
    %v1385 = vunpack.c.l.b16 %v1251
    %v1386 = vunpack.c.h.b16 %v1251
    %v1387 = vunpack.c.l.b16 %v1252
    %v1388 = vunpack.c.h.b16 %v1252
    %v1389 = vunpack.c.l.b16 %v1253
    %v1390 = vunpack.c.h.b16 %v1253
    %v1391 = vunpack.c.l.b16 %v1254
    %v1392 = vunpack.c.l.b16 %v1255
    %v1393 = vunpack.c.h.b16 %v1255
    %v1394 = vunpack.c.l.b16 %v1256
    %v1395 = vunpack.c.h.b16 %v1256
    %v1396 = vunpack.c.l.b16 %v1257
    %v1397 = vunpack.c.h.b16 %v1257
    %v1398 = vunpack.c.l.b16 %v1258
    %v1399 = vunpack.c.l.b16 %v1259
    %v1400 = vunpack.c.h.b16 %v1259
    %v1401 = vunpack.c.l.b16 %v1260
    %v1402 = vunpack.c.h.b16 %v1260
    %v1403 = vunpack.c.l.b16 %v1261
    %v1404 = vunpack.c.h.b16 %v1261
    %v1405 = vunpack.c.l.b16 %v1262
    %v1406 = vunpack.c.l.b16 %v1263
    %v1407 = vunpack.c.h.b16 %v1263
    %v1408 = vunpack.c.l.b16 %v1264
    %v1409 = vunpack.c.h.b16 %v1264
    %v1410 = vunpack.c.l.b16 %v1265
    %v1411 = vunpack.c.h.b16 %v1265
    %v1412 = vunpack.c.l.b16 %v1266
    %v1413 = vunpack.c.l.b16 %v1267
    %v1414 = vunpack.c.h.b16 %v1267
    %v1415 = vunpack.c.l.b16 %v1268
    %v1416 = vunpack.c.h.b16 %v1268
    %v1417 = vunpack.c.l.b16 %v1269
    %v1418 = vunpack.c.h.b16 %v1269
    %v1419 = vunpack.c.l.b16 %v1270
    %v1420 = vunpack.c.l.b16 %v1271
    %v1421 = vunpack.c.h.b16 %v1271
    %v1422 = vunpack.c.l.b16 %v1272
    %v1423 = vunpack.c.h.b16 %v1272
    %v1424 = vunpack.c.l.b16 %v1273
    %v1425 = vunpack.c.h.b16 %v1273
    %v1426 = vunpack.c.l.b16 %v1274
    %v1427 = vunpack.c.l.b16 %v1275
    %v1428 = vunpack.c.h.b16 %v1275
    %v1429 = vunpack.c.l.b16 %v1276
    %v1430 = vunpack.c.h.b16 %v1276
    %v1431 = vunpack.c.l.b16 %v1277
    %v1432 = vunpack.c.h.b16 %v1277
    %v1433 = vunpack.c.l.b16 %v1278
    %v1434 = vunpack.c.l.b16 %v1279
    %v1435 = vunpack.c.h.b16 %v1279
    %v1436 = vunpack.c.l.b16 %v1280
    %v1437 = vunpack.c.h.b16 %v1280
    %v1438 = vunpack.c.l.b16 %v1281
    %v1439 = vunpack.c.h.b16 %v1281
    %v1440 = vunpack.c.l.b16 %v1282
    %v1441 = vunpack.c.l.b16 %v1283
    %v1442 = vunpack.c.h.b16 %v1283
    %v1443 = vunpack.c.l.b16 %v1284
    %v1444 = vunpack.c.h.b16 %v1284
    %v1445 = vunpack.c.l.b16 %v1285
    %v1446 = vunpack.c.h.b16 %v1285
    %v1447 = vunpack.c.l.b16 %v1286
    %v1448 = vunpack.c.l.b16 %v1287
    %v1449 = vunpack.c.h.b16 %v1287
    %v1450 = vunpack.c.l.b16 %v1288
    %v1451 = vunpack.c.h.b16 %v1288
    %v1452 = vunpack.c.l.b16 %v1289
    %v1453 = vunpack.c.h.b16 %v1289
    %v1454 = vunpack.c.l.b16 %v1290
    %v1455 = vunpack.c.l.b16 %v1291
    %v1456 = vunpack.c.h.b16 %v1291
    %v1457 = vunpack.c.l.b16 %v1292
    %v1458 = vunpack.c.h.b16 %v1292
    %v1459 = vunpack.c.l.b16 %v1293
    %v1460 = vunpack.c.h.b16 %v1293
    %v1461 = vunpack.c.l.b16 %v1294
    %v1462 = vunpack.c.l.b16 %v1295
    %v1463 = vunpack.c.h.b16 %v1295
    %v1464 = vunpack.c.l.b16 %v1296
    %v1465 = vunpack.c.h.b16 %v1296
    %v1466 = vunpack.c.l.b16 %v1297
    %v1467 = vunpack.c.h.b16 %v1297
    %v1468 = vunpack.c.l.b16 %v1298
    %v1469 = vunpack.c.l.b16 %v1299
    %v1470 = vunpack.c.h.b16 %v1299
    %v1471 = vunpack.c.l.b16 %v1300
    %v1472 = vunpack.c.h.b16 %v1300
    %v1473 = vunpack.c.l.b16 %v1301
    %v1474 = vunpack.c.h.b16 %v1301
    %v1475 = vunpack.c.l.b16 %v1302
    %v1476 = vunpack.c.l.b16 %v1303
    %v1477 = vunpack.c.h.b16 %v1303
    %v1478 = vunpack.c.l.b16 %v1304
    %v1479 = vunpack.c.h.b16 %v1304
    %v1480 = vunpack.c.l.b16 %v1305
    %v1481 = vunpack.c.h.b16 %v1305
    %v1482 = vunpack.c.l.b16 %v1306
    %v1483 = vpack.c.b16 %v1378, %v1371
    %v1484 = vpack.c.b16 %v1379, %v1372
    %v1485 = vpack.c.b16 %v1380, %v1373
    %v1486 = vpack.c.b16 %v1381, %v1374
    %v1487 = vpack.c.b16 %v1382, %v1375
    %v1488 = vpack.c.b16 %v1383, %v1376
    %v1489 = vpack.c.b16 %v1384, %v1377
    %v1490 = vpack.c.b16 %v1392, %v1385
    %v1491 = vpack.c.b16 %v1393, %v1386
    %v1492 = vpack.c.b16 %v1394, %v1387
    %v1493 = vpack.c.b16 %v1395, %v1388
    %v1494 = vpack.c.b16 %v1396, %v1389
    %v1495 = vpack.c.b16 %v1397, %v1390
    %v1496 = vpack.c.b16 %v1398, %v1391
    %v1497 = vpack.c.b16 %v1406, %v1399
    %v1498 = vpack.c.b16 %v1407, %v1400
    %v1499 = vpack.c.b16 %v1408, %v1401
    %v1500 = vpack.c.b16 %v1409, %v1402
    %v1501 = vpack.c.b16 %v1410, %v1403
    %v1502 = vpack.c.b16 %v1411, %v1404
    %v1503 = vpack.c.b16 %v1412, %v1405
    %v1504 = vpack.c.b16 %v1420, %v1413
    %v1505 = vpack.c.b16 %v1421, %v1414
    %v1506 = vpack.c.b16 %v1422, %v1415
    %v1507 = vpack.c.b16 %v1423, %v1416
    %v1508 = vpack.c.b16 %v1424, %v1417
    %v1509 = vpack.c.b16 %v1425, %v1418
    %v1510 = vpack.c.b16 %v1426, %v1419
    %v1511 = vpack.c.b16 %v1434, %v1427
    %v1512 = vpack.c.b16 %v1435, %v1428
    %v1513 = vpack.c.b16 %v1436, %v1429
    %v1514 = vpack.c.b16 %v1437, %v1430
    %v1515 = vpack.c.b16 %v1438, %v1431
    %v1516 = vpack.c.b16 %v1439, %v1432
    %v1517 = vpack.c.b16 %v1440, %v1433
    %v1518 = vpack.c.b16 %v1448, %v1441
    %v1519 = vpack.c.b16 %v1449, %v1442
    %v1520 = vpack.c.b16 %v1450, %v1443
    %v1521 = vpack.c.b16 %v1451, %v1444
    %v1522 = vpack.c.b16 %v1452, %v1445
    %v1523 = vpack.c.b16 %v1453, %v1446
    %v1524 = vpack.c.b16 %v1454, %v1447
    %v1525 = vpack.c.b16 %v1462, %v1455
    %v1526 = vpack.c.b16 %v1463, %v1456
    %v1527 = vpack.c.b16 %v1464, %v1457
    %v1528 = vpack.c.b16 %v1465, %v1458
    %v1529 = vpack.c.b16 %v1466, %v1459
    %v1530 = vpack.c.b16 %v1467, %v1460
    %v1531 = vpack.c.b16 %v1468, %v1461
    %v1532 = vpack.c.b16 %v1476, %v1469
    %v1533 = vpack.c.b16 %v1477, %v1470
    %v1534 = vpack.c.b16 %v1478, %v1471
    %v1535 = vpack.c.b16 %v1479, %v1472
    %v1536 = vpack.c.b16 %v1480, %v1473
    %v1537 = vpack.c.b16 %v1481, %v1474
    %v1538 = vpack.c.b16 %v1482, %v1475
    %1595 = vmatpush.bf16.msra.mxu0 %v1532
    %1596 = vmatpush.bf16.msra.mxu0 %v1525
    %1597 = vmatpush.bf16.msra.mxu0 %v1518
    %1598 = vmatpush.bf16.msra.mxu0 %v1511
    %1599 = vmatpush.bf16.msra.mxu0 %v1504
    %1600 = vmatpush.bf16.msra.mxu0 %v1497
    %1601 = vmatpush.bf16.msra.mxu0 %v1490
    %1602 = vmatpush.bf16.msra.mxu0 %v1483
    %1603 = vmatmul.bf16.gmra.mxu0 %v1241
    %v1604 = vpop.f32.mrf.mxu0
    %v1605 = vadd.f32 0.0, %v1604
    %v1606 = vpop.f32.mrf.mxu0
    %v1607 = vadd.f32 0.0, %v1606
    %1608 = vdwg.mxu0
    %1609 = vmatpush.bf16.msra.mxu0 %v1533
    %1610 = vmatpush.bf16.msra.mxu0 %v1526
    %1611 = vmatpush.bf16.msra.mxu0 %v1519
    %1612 = vmatpush.bf16.msra.mxu0 %v1512
    %1613 = vmatpush.bf16.msra.mxu0 %v1505
    %1614 = vmatpush.bf16.msra.mxu0 %v1498
    %1615 = vmatpush.bf16.msra.mxu0 %v1491
    %1616 = vmatpush.bf16.msra.mxu0 %v1484
    %1617 = vmatmul.bf16.gmra.mxu0 %v1241
    %v1618 = vpop.f32.mrf.mxu0
    %v1619 = vadd.f32 0.0, %v1618
    %v1620 = vpop.f32.mrf.mxu0
    %v1621 = vadd.f32 0.0, %v1620
    %1622 = vdwg.mxu0
    %1623 = vmatpush.bf16.msra.mxu0 %v1534
    %1624 = vmatpush.bf16.msra.mxu0 %v1527
    %1625 = vmatpush.bf16.msra.mxu0 %v1520
    %1626 = vmatpush.bf16.msra.mxu0 %v1513
    %1627 = vmatpush.bf16.msra.mxu0 %v1506
    %1628 = vmatpush.bf16.msra.mxu0 %v1499
    %1629 = vmatpush.bf16.msra.mxu0 %v1492
    %1630 = vmatpush.bf16.msra.mxu0 %v1485
    %1631 = vmatmul.bf16.gmra.mxu0 %v1241
    %v1632 = vpop.f32.mrf.mxu0
    %v1633 = vadd.f32 0.0, %v1632
    %v1634 = vpop.f32.mrf.mxu0
    %v1635 = vadd.f32 0.0, %v1634
    %1636 = vdwg.mxu0
    %1637 = vmatpush.bf16.msra.mxu0 %v1535
    %1638 = vmatpush.bf16.msra.mxu0 %v1528
    %1639 = vmatpush.bf16.msra.mxu0 %v1521
    %1640 = vmatpush.bf16.msra.mxu0 %v1514
    %1641 = vmatpush.bf16.msra.mxu0 %v1507
    %1642 = vmatpush.bf16.msra.mxu0 %v1500
    %1643 = vmatpush.bf16.msra.mxu0 %v1493
    %1644 = vmatpush.bf16.msra.mxu0 %v1486
    %1645 = vmatmul.bf16.gmra.mxu0 %v1241
    %v1646 = vpop.f32.mrf.mxu0
    %v1647 = vadd.f32 0.0, %v1646
    %v1648 = vpop.f32.mrf.mxu0
    %v1649 = vadd.f32 0.0, %v1648
    %1650 = vdwg.mxu0
    %1651 = vmatpush.bf16.msra.mxu0 %v1536
    %1652 = vmatpush.bf16.msra.mxu0 %v1529
    %1653 = vmatpush.bf16.msra.mxu0 %v1522
    %1654 = vmatpush.bf16.msra.mxu0 %v1515
    %1655 = vmatpush.bf16.msra.mxu0 %v1508
    %1656 = vmatpush.bf16.msra.mxu0 %v1501
    %1657 = vmatpush.bf16.msra.mxu0 %v1494
    %1658 = vmatpush.bf16.msra.mxu0 %v1487
    %1659 = vmatmul.bf16.gmra.mxu0 %v1241
    %v1660 = vpop.f32.mrf.mxu0
    %v1661 = vadd.f32 0.0, %v1660
    %v1662 = vpop.f32.mrf.mxu0
    %v1663 = vadd.f32 0.0, %v1662
    %1664 = vdwg.mxu0
    %1665 = vmatpush.bf16.msra.mxu0 %v1537
    %1666 = vmatpush.bf16.msra.mxu0 %v1530
    %1667 = vmatpush.bf16.msra.mxu0 %v1523
    %1668 = vmatpush.bf16.msra.mxu0 %v1516
    %1669 = vmatpush.bf16.msra.mxu0 %v1509
    %1670 = vmatpush.bf16.msra.mxu0 %v1502
    %1671 = vmatpush.bf16.msra.mxu0 %v1495
    %1672 = vmatpush.bf16.msra.mxu0 %v1488
    %1673 = vmatmul.bf16.gmra.mxu0 %v1241
    %v1674 = vpop.f32.mrf.mxu0
    %v1675 = vadd.f32 0.0, %v1674
    %v1676 = vpop.f32.mrf.mxu0
    %v1677 = vadd.f32 0.0, %v1676
    %1678 = vdwg.mxu0
    %1679 = vmatpush.bf16.msra.mxu0 %v1538
    %1680 = vmatpush.bf16.msra.mxu0 %v1531
    %1681 = vmatpush.bf16.msra.mxu0 %v1524
    %1682 = vmatpush.bf16.msra.mxu0 %v1517
    %1683 = vmatpush.bf16.msra.mxu0 %v1510
    %1684 = vmatpush.bf16.msra.mxu0 %v1503
    %1685 = vmatpush.bf16.msra.mxu0 %v1496
    %1686 = vmatpush.bf16.msra.mxu0 %v1489
    %1687 = vmatmul.bf16.gmra.mxu0 %v1241
    %v1688 = vpop.f32.mrf.mxu0
    %v1689 = vadd.f32 0.0, %v1688
    %v1690 = vpop.f32.mrf.mxu0
    %v1691 = vadd.f32 0.0, %v1690
    %1692 = vdwg.mxu0
    %v1693 = vrot.slane %v1605, 5
    %v1694 = vrot.slane %v1607, 5
    %v1695 = vsel %vm580, %v1693, %v1694
    %v1696 = vsel %vm580, %v1694, %v1693
    %v1697 = vsel %vm583, %v1696, 0.0
    %v1698 = vsel %vm584, %v1695, 0.0
    %v1699 = vadd.f32 %v1647, %v1697
    %v1700 = vadd.f32 %v1649, %v1698
    %v1701 = vrot.slane %v1619, 6
    %v1702 = vrot.slane %v1621, 6
    %v1703 = vsel %vm591, %v1701, %v1702
    %v1704 = vsel %vm591, %v1702, %v1701
    %v1705 = vsel %vm594, %v1704, 0.0
    %v1706 = vsel %vm595, %v1703, 0.0
    %v1707 = vadd.f32 %v1699, %v1705
    %v1708 = vadd.f32 %v1700, %v1706
    %v1709 = vrot.slane %v1633, 7
    %v1710 = vrot.slane %v1635, 7
    %v1711 = vsel %vm602, %v1709, %v1710
    %v1712 = vsel %vm602, %v1710, %v1709
    %v1713 = vsel %vm605, %v1712, 0.0
    %v1714 = vsel %vm606, %v1711, 0.0
    %v1715 = vadd.f32 %v1707, %v1713
    %v1716 = vadd.f32 %v1708, %v1714
    %v1717 = vrot.slane %v1661, 1
    %v1718 = vrot.slane %v1663, 1
    %v1719 = vsel %vm613, %v1717, %v1718
    %v1720 = vsel %vm613, %v1718, %v1717
    %v1721 = vsel %vm616, %v1719, 0.0
    %v1722 = vsel %vm617, %v1720, 0.0
    %v1723 = vadd.f32 %v1715, %v1721
    %v1724 = vadd.f32 %v1716, %v1722
    %v1725 = vrot.slane %v1675, 2
    %v1726 = vrot.slane %v1677, 2
    %v1727 = vsel %vm624, %v1725, %v1726
    %v1728 = vsel %vm624, %v1726, %v1725
    %v1729 = vsel %vm627, %v1727, 0.0
    %v1730 = vsel %vm628, %v1728, 0.0
    %v1731 = vadd.f32 %v1723, %v1729
    %v1732 = vadd.f32 %v1724, %v1730
    %v1733 = vrot.slane %v1689, 3
    %v1734 = vrot.slane %v1691, 3
    %v1735 = vsel %vm635, %v1733, %v1734
    %v1736 = vsel %vm635, %v1734, %v1733
    %v1737 = vsel %vm638, %v1735, 0.0
    %v1738 = vsel %vm639, %v1736, 0.0
    %v1739 = vadd.f32 %v1731, %v1737
    %v1740 = vadd.f32 %v1732, %v1738
    %s1741 = scalar_lea.vmem %s2, 2
    %v1742 = vld [vmem:[%s1741] sm:$0x1]
    %v1744 = vperm.slane %v1742, 0
    %v1746 = vadd.f32 %v1739, %v1744
    %v1747 = vadd.f32 %v1740, %v1744
    %v1748 = vadd.f32 %v1746, %v1199
    %v1749 = vadd.f32 %v1747, %v1200
    %1750 = vadd.xlane.f32.xlu0 %v1748
    %v1751 = vpop.xlane.xlu0 %1750
    %1752 = vadd.xlane.f32.xlu0 %v1749
    %v1753 = vpop.xlane.xlu0 %1752
    %v1754 = vmul.f32 %v1751, %v90
    %v1755 = vmul.f32 %v1753, %v90
    %v1756 = vsub.f32 %v1748, %v1754
    %v1757 = vsub.f32 %v1749, %v1755
    %v1758 = vmul.f32 %v1756, %v1756
    %v1759 = vmul.f32 %v1757, %v1757
    %1760 = vadd.xlane.f32.xlu0 %v1758
    %v1761 = vpop.xlane.xlu0 %1760
    %1762 = vadd.xlane.f32.xlu0 %v1759
    %v1763 = vpop.xlane.xlu0 %1762
    %v1764 = vmul.f32 %v1761, %v90
    %v1765 = vmul.f32 %v1763, %v90
    %v1766 = vadd.f32 %v1764, 1e-05
    %v1767 = vadd.f32 %v1765, 1e-05
    %v1768 = vrsqrt.pop %v1766
    %v1769 = vmul.f32 %v1768, %v1766
    %v1770 = vmul.f32 %v1769, %v1768
    %v1771 = vmul.f32 0.5, %v1770
    %v1772 = vsub.f32 1.5, %v1771
    %v1773 = vmul.f32 %v1768, %v1772
    %vm1774 = vweird.f32 %v1766
    %vm1775 = vweird.f32 %v1768
    %vm1776 = vmor %vm1774, %vm1775
    %v1777 = vsel %vm1776, %v1768, %v1773
    %v1778 = vrsqrt.pop %v1767
    %v1779 = vmul.f32 %v1778, %v1767
    %v1780 = vmul.f32 %v1779, %v1778
    %v1781 = vmul.f32 0.5, %v1780
    %v1782 = vsub.f32 1.5, %v1781
    %v1783 = vmul.f32 %v1778, %v1782
    %vm1784 = vweird.f32 %v1767
    %vm1785 = vweird.f32 %v1778
    %vm1786 = vmor %vm1784, %vm1785
    %v1787 = vsel %vm1786, %v1778, %v1783
    %v1788 = vmul.f32 %v1756, %v1777
    %v1789 = vmul.f32 %v1757, %v1787
    %v1790 = vpack.c.bf16 %v1789, %v1788
    %s1791 = scalar_lea.vmem [#allocation2], 1344
    %v1792 = vld [vmem:[%s1791] sm:$0xff]
    %v1793 = vld [vmem:[%s1791 + $0x8] sm:$0xff]
    %v1794 = vld [vmem:[%s1791 + $0x10] sm:$0xff]
    %v1795 = vld [vmem:[%s1791 + $0x18] sm:$0xf]
    %v1796 = vld [vmem:[%s1791 + $0x1c] sm:$0xff]
    %v1797 = vld [vmem:[%s1791 + $0x24] sm:$0xff]
    %v1798 = vld [vmem:[%s1791 + $0x2c] sm:$0xff]
    %v1799 = vld [vmem:[%s1791 + $0x34] sm:$0xf]
    %v1800 = vld [vmem:[%s1791 + $0x38] sm:$0xff]
    %v1801 = vld [vmem:[%s1791 + $0x40] sm:$0xff]
    %v1802 = vld [vmem:[%s1791 + $0x48] sm:$0xff]
    %v1803 = vld [vmem:[%s1791 + $0x50] sm:$0xf]
    %v1804 = vld [vmem:[%s1791 + $0x54] sm:$0xff]
    %v1805 = vld [vmem:[%s1791 + $0x5c] sm:$0xff]
    %v1806 = vld [vmem:[%s1791 + $0x64] sm:$0xff]
    %v1807 = vld [vmem:[%s1791 + $0x6c] sm:$0xf]
    %v1808 = vld [vmem:[%s1791 + $0x70] sm:$0xff]
    %v1809 = vld [vmem:[%s1791 + $0x78] sm:$0xff]
    %v1810 = vld [vmem:[%s1791 + $0x80] sm:$0xff]
    %v1811 = vld [vmem:[%s1791 + $0x88] sm:$0xf]
    %v1812 = vld [vmem:[%s1791 + $0x8c] sm:$0xff]
    %v1813 = vld [vmem:[%s1791 + $0x94] sm:$0xff]
    %v1814 = vld [vmem:[%s1791 + $0x9c] sm:$0xff]
    %v1815 = vld [vmem:[%s1791 + $0xa4] sm:$0xf]
    %v1816 = vld [vmem:[%s1791 + $0xa8] sm:$0xff]
    %v1817 = vld [vmem:[%s1791 + $0xb0] sm:$0xff]
    %v1818 = vld [vmem:[%s1791 + $0xb8] sm:$0xff]
    %v1819 = vld [vmem:[%s1791 + $0xc0] sm:$0xf]
    %v1820 = vld [vmem:[%s1791 + $0xc4] sm:$0xff]
    %v1821 = vld [vmem:[%s1791 + $0xcc] sm:$0xff]
    %v1822 = vld [vmem:[%s1791 + $0xd4] sm:$0xff]
    %v1823 = vld [vmem:[%s1791 + $0xdc] sm:$0xf]
    %v1824 = vld [vmem:[%s1791 + $0xe0] sm:$0xff]
    %v1825 = vld [vmem:[%s1791 + $0xe8] sm:$0xff]
    %v1826 = vld [vmem:[%s1791 + $0xf0] sm:$0xff]
    %v1827 = vld [vmem:[%s1791 + $0xf8] sm:$0xf]
    %v1828 = vld [vmem:[%s1791 + $0xfc] sm:$0xff]
    %v1829 = vld [vmem:[%s1791 + $0x104] sm:$0xff]
    %v1830 = vld [vmem:[%s1791 + $0x10c] sm:$0xff]
    %v1831 = vld [vmem:[%s1791 + $0x114] sm:$0xf]
    %v1832 = vld [vmem:[%s1791 + $0x118] sm:$0xff]
    %v1833 = vld [vmem:[%s1791 + $0x120] sm:$0xff]
    %v1834 = vld [vmem:[%s1791 + $0x128] sm:$0xff]
    %v1835 = vld [vmem:[%s1791 + $0x130] sm:$0xf]
    %v1836 = vld [vmem:[%s1791 + $0x134] sm:$0xff]
    %v1837 = vld [vmem:[%s1791 + $0x13c] sm:$0xff]
    %v1838 = vld [vmem:[%s1791 + $0x144] sm:$0xff]
    %v1839 = vld [vmem:[%s1791 + $0x14c] sm:$0xf]
    %v1840 = vld [vmem:[%s1791 + $0x150] sm:$0xff]
    %v1841 = vld [vmem:[%s1791 + $0x158] sm:$0xff]
    %v1842 = vld [vmem:[%s1791 + $0x160] sm:$0xff]
    %v1843 = vld [vmem:[%s1791 + $0x168] sm:$0xf]
    %v1844 = vld [vmem:[%s1791 + $0x16c] sm:$0xff]
    %v1845 = vld [vmem:[%s1791 + $0x174] sm:$0xff]
    %v1846 = vld [vmem:[%s1791 + $0x17c] sm:$0xff]
    %v1847 = vld [vmem:[%s1791 + $0x184] sm:$0xf]
    %v1848 = vld [vmem:[%s1791 + $0x188] sm:$0xff]
    %v1849 = vld [vmem:[%s1791 + $0x190] sm:$0xff]
    %v1850 = vld [vmem:[%s1791 + $0x198] sm:$0xff]
    %v1851 = vld [vmem:[%s1791 + $0x1a0] sm:$0xf]
    %v1852 = vld [vmem:[%s1791 + $0x1a4] sm:$0xff]
    %v1853 = vld [vmem:[%s1791 + $0x1ac] sm:$0xff]
    %v1854 = vld [vmem:[%s1791 + $0x1b4] sm:$0xff]
    %v1855 = vld [vmem:[%s1791 + $0x1bc] sm:$0xf]
    %v1920 = vunpack.c.l.b16 %v1792
    %v1921 = vunpack.c.h.b16 %v1792
    %v1922 = vunpack.c.l.b16 %v1793
    %v1923 = vunpack.c.h.b16 %v1793
    %v1924 = vunpack.c.l.b16 %v1794
    %v1925 = vunpack.c.h.b16 %v1794
    %v1926 = vunpack.c.l.b16 %v1795
    %v1927 = vunpack.c.l.b16 %v1796
    %v1928 = vunpack.c.h.b16 %v1796
    %v1929 = vunpack.c.l.b16 %v1797
    %v1930 = vunpack.c.h.b16 %v1797
    %v1931 = vunpack.c.l.b16 %v1798
    %v1932 = vunpack.c.h.b16 %v1798
    %v1933 = vunpack.c.l.b16 %v1799
    %v1934 = vunpack.c.l.b16 %v1800
    %v1935 = vunpack.c.h.b16 %v1800
    %v1936 = vunpack.c.l.b16 %v1801
    %v1937 = vunpack.c.h.b16 %v1801
    %v1938 = vunpack.c.l.b16 %v1802
    %v1939 = vunpack.c.h.b16 %v1802
    %v1940 = vunpack.c.l.b16 %v1803
    %v1941 = vunpack.c.l.b16 %v1804
    %v1942 = vunpack.c.h.b16 %v1804
    %v1943 = vunpack.c.l.b16 %v1805
    %v1944 = vunpack.c.h.b16 %v1805
    %v1945 = vunpack.c.l.b16 %v1806
    %v1946 = vunpack.c.h.b16 %v1806
    %v1947 = vunpack.c.l.b16 %v1807
    %v1948 = vunpack.c.l.b16 %v1808
    %v1949 = vunpack.c.h.b16 %v1808
    %v1950 = vunpack.c.l.b16 %v1809
    %v1951 = vunpack.c.h.b16 %v1809
    %v1952 = vunpack.c.l.b16 %v1810
    %v1953 = vunpack.c.h.b16 %v1810
    %v1954 = vunpack.c.l.b16 %v1811
    %v1955 = vunpack.c.l.b16 %v1812
    %v1956 = vunpack.c.h.b16 %v1812
    %v1957 = vunpack.c.l.b16 %v1813
    %v1958 = vunpack.c.h.b16 %v1813
    %v1959 = vunpack.c.l.b16 %v1814
    %v1960 = vunpack.c.h.b16 %v1814
    %v1961 = vunpack.c.l.b16 %v1815
    %v1962 = vunpack.c.l.b16 %v1816
    %v1963 = vunpack.c.h.b16 %v1816
    %v1964 = vunpack.c.l.b16 %v1817
    %v1965 = vunpack.c.h.b16 %v1817
    %v1966 = vunpack.c.l.b16 %v1818
    %v1967 = vunpack.c.h.b16 %v1818
    %v1968 = vunpack.c.l.b16 %v1819
    %v1969 = vunpack.c.l.b16 %v1820
    %v1970 = vunpack.c.h.b16 %v1820
    %v1971 = vunpack.c.l.b16 %v1821
    %v1972 = vunpack.c.h.b16 %v1821
    %v1973 = vunpack.c.l.b16 %v1822
    %v1974 = vunpack.c.h.b16 %v1822
    %v1975 = vunpack.c.l.b16 %v1823
    %v1976 = vunpack.c.l.b16 %v1824
    %v1977 = vunpack.c.h.b16 %v1824
    %v1978 = vunpack.c.l.b16 %v1825
    %v1979 = vunpack.c.h.b16 %v1825
    %v1980 = vunpack.c.l.b16 %v1826
    %v1981 = vunpack.c.h.b16 %v1826
    %v1982 = vunpack.c.l.b16 %v1827
    %v1983 = vunpack.c.l.b16 %v1828
    %v1984 = vunpack.c.h.b16 %v1828
    %v1985 = vunpack.c.l.b16 %v1829
    %v1986 = vunpack.c.h.b16 %v1829
    %v1987 = vunpack.c.l.b16 %v1830
    %v1988 = vunpack.c.h.b16 %v1830
    %v1989 = vunpack.c.l.b16 %v1831
    %v1990 = vunpack.c.l.b16 %v1832
    %v1991 = vunpack.c.h.b16 %v1832
    %v1992 = vunpack.c.l.b16 %v1833
    %v1993 = vunpack.c.h.b16 %v1833
    %v1994 = vunpack.c.l.b16 %v1834
    %v1995 = vunpack.c.h.b16 %v1834
    %v1996 = vunpack.c.l.b16 %v1835
    %v1997 = vunpack.c.l.b16 %v1836
    %v1998 = vunpack.c.h.b16 %v1836
    %v1999 = vunpack.c.l.b16 %v1837
    %v2000 = vunpack.c.h.b16 %v1837
    %v2001 = vunpack.c.l.b16 %v1838
    %v2002 = vunpack.c.h.b16 %v1838
    %v2003 = vunpack.c.l.b16 %v1839
    %v2004 = vunpack.c.l.b16 %v1840
    %v2005 = vunpack.c.h.b16 %v1840
    %v2006 = vunpack.c.l.b16 %v1841
    %v2007 = vunpack.c.h.b16 %v1841
    %v2008 = vunpack.c.l.b16 %v1842
    %v2009 = vunpack.c.h.b16 %v1842
    %v2010 = vunpack.c.l.b16 %v1843
    %v2011 = vunpack.c.l.b16 %v1844
    %v2012 = vunpack.c.h.b16 %v1844
    %v2013 = vunpack.c.l.b16 %v1845
    %v2014 = vunpack.c.h.b16 %v1845
    %v2015 = vunpack.c.l.b16 %v1846
    %v2016 = vunpack.c.h.b16 %v1846
    %v2017 = vunpack.c.l.b16 %v1847
    %v2018 = vunpack.c.l.b16 %v1848
    %v2019 = vunpack.c.h.b16 %v1848
    %v2020 = vunpack.c.l.b16 %v1849
    %v2021 = vunpack.c.h.b16 %v1849
    %v2022 = vunpack.c.l.b16 %v1850
    %v2023 = vunpack.c.h.b16 %v1850
    %v2024 = vunpack.c.l.b16 %v1851
    %v2025 = vunpack.c.l.b16 %v1852
    %v2026 = vunpack.c.h.b16 %v1852
    %v2027 = vunpack.c.l.b16 %v1853
    %v2028 = vunpack.c.h.b16 %v1853
    %v2029 = vunpack.c.l.b16 %v1854
    %v2030 = vunpack.c.h.b16 %v1854
    %v2031 = vunpack.c.l.b16 %v1855
    %v2032 = vpack.c.b16 %v1927, %v1920
    %v2033 = vpack.c.b16 %v1928, %v1921
    %v2034 = vpack.c.b16 %v1929, %v1922
    %v2035 = vpack.c.b16 %v1930, %v1923
    %v2036 = vpack.c.b16 %v1931, %v1924
    %v2037 = vpack.c.b16 %v1932, %v1925
    %v2038 = vpack.c.b16 %v1933, %v1926
    %v2039 = vpack.c.b16 %v1941, %v1934
    %v2040 = vpack.c.b16 %v1942, %v1935
    %v2041 = vpack.c.b16 %v1943, %v1936
    %v2042 = vpack.c.b16 %v1944, %v1937
    %v2043 = vpack.c.b16 %v1945, %v1938
    %v2044 = vpack.c.b16 %v1946, %v1939
    %v2045 = vpack.c.b16 %v1947, %v1940
    %v2046 = vpack.c.b16 %v1955, %v1948
    %v2047 = vpack.c.b16 %v1956, %v1949
    %v2048 = vpack.c.b16 %v1957, %v1950
    %v2049 = vpack.c.b16 %v1958, %v1951
    %v2050 = vpack.c.b16 %v1959, %v1952
    %v2051 = vpack.c.b16 %v1960, %v1953
    %v2052 = vpack.c.b16 %v1961, %v1954
    %v2053 = vpack.c.b16 %v1969, %v1962
    %v2054 = vpack.c.b16 %v1970, %v1963
    %v2055 = vpack.c.b16 %v1971, %v1964
    %v2056 = vpack.c.b16 %v1972, %v1965
    %v2057 = vpack.c.b16 %v1973, %v1966
    %v2058 = vpack.c.b16 %v1974, %v1967
    %v2059 = vpack.c.b16 %v1975, %v1968
    %v2060 = vpack.c.b16 %v1983, %v1976
    %v2061 = vpack.c.b16 %v1984, %v1977
    %v2062 = vpack.c.b16 %v1985, %v1978
    %v2063 = vpack.c.b16 %v1986, %v1979
    %v2064 = vpack.c.b16 %v1987, %v1980
    %v2065 = vpack.c.b16 %v1988, %v1981
    %v2066 = vpack.c.b16 %v1989, %v1982
    %v2067 = vpack.c.b16 %v1997, %v1990
    %v2068 = vpack.c.b16 %v1998, %v1991
    %v2069 = vpack.c.b16 %v1999, %v1992
    %v2070 = vpack.c.b16 %v2000, %v1993
    %v2071 = vpack.c.b16 %v2001, %v1994
    %v2072 = vpack.c.b16 %v2002, %v1995
    %v2073 = vpack.c.b16 %v2003, %v1996
    %v2074 = vpack.c.b16 %v2011, %v2004
    %v2075 = vpack.c.b16 %v2012, %v2005
    %v2076 = vpack.c.b16 %v2013, %v2006
    %v2077 = vpack.c.b16 %v2014, %v2007
    %v2078 = vpack.c.b16 %v2015, %v2008
    %v2079 = vpack.c.b16 %v2016, %v2009
    %v2080 = vpack.c.b16 %v2017, %v2010
    %v2081 = vpack.c.b16 %v2025, %v2018
    %v2082 = vpack.c.b16 %v2026, %v2019
    %v2083 = vpack.c.b16 %v2027, %v2020
    %v2084 = vpack.c.b16 %v2028, %v2021
    %v2085 = vpack.c.b16 %v2029, %v2022
    %v2086 = vpack.c.b16 %v2030, %v2023
    %v2087 = vpack.c.b16 %v2031, %v2024
    %2144 = vmatpush.bf16.msra.mxu0 %v2081
    %2145 = vmatpush.bf16.msra.mxu0 %v2074
    %2146 = vmatpush.bf16.msra.mxu0 %v2067
    %2147 = vmatpush.bf16.msra.mxu0 %v2060
    %2148 = vmatpush.bf16.msra.mxu0 %v2053
    %2149 = vmatpush.bf16.msra.mxu0 %v2046
    %2150 = vmatpush.bf16.msra.mxu0 %v2039
    %2151 = vmatpush.bf16.msra.mxu0 %v2032
    %2152 = vmatmul.bf16.gmra.mxu0 %v1790
    %v2153 = vpop.f32.mrf.mxu0
    %v2154 = vadd.f32 0.0, %v2153
    %v2155 = vpop.f32.mrf.mxu0
    %v2156 = vadd.f32 0.0, %v2155
    %2157 = vdwg.mxu0
    %2158 = vmatpush.bf16.msra.mxu0 %v2082
    %2159 = vmatpush.bf16.msra.mxu0 %v2075
    %2160 = vmatpush.bf16.msra.mxu0 %v2068
    %2161 = vmatpush.bf16.msra.mxu0 %v2061
    %2162 = vmatpush.bf16.msra.mxu0 %v2054
    %2163 = vmatpush.bf16.msra.mxu0 %v2047
    %2164 = vmatpush.bf16.msra.mxu0 %v2040
    %2165 = vmatpush.bf16.msra.mxu0 %v2033
    %2166 = vmatmul.bf16.gmra.mxu0 %v1790
    %v2167 = vpop.f32.mrf.mxu0
    %v2168 = vadd.f32 0.0, %v2167
    %v2169 = vpop.f32.mrf.mxu0
    %v2170 = vadd.f32 0.0, %v2169
    %2171 = vdwg.mxu0
    %2172 = vmatpush.bf16.msra.mxu0 %v2083
    %2173 = vmatpush.bf16.msra.mxu0 %v2076
    %2174 = vmatpush.bf16.msra.mxu0 %v2069
    %2175 = vmatpush.bf16.msra.mxu0 %v2062
    %2176 = vmatpush.bf16.msra.mxu0 %v2055
    %2177 = vmatpush.bf16.msra.mxu0 %v2048
    %2178 = vmatpush.bf16.msra.mxu0 %v2041
    %2179 = vmatpush.bf16.msra.mxu0 %v2034
    %2180 = vmatmul.bf16.gmra.mxu0 %v1790
    %v2181 = vpop.f32.mrf.mxu0
    %v2182 = vadd.f32 0.0, %v2181
    %v2183 = vpop.f32.mrf.mxu0
    %v2184 = vadd.f32 0.0, %v2183
    %2185 = vdwg.mxu0
    %2186 = vmatpush.bf16.msra.mxu0 %v2084
    %2187 = vmatpush.bf16.msra.mxu0 %v2077
    %2188 = vmatpush.bf16.msra.mxu0 %v2070
    %2189 = vmatpush.bf16.msra.mxu0 %v2063
    %2190 = vmatpush.bf16.msra.mxu0 %v2056
    %2191 = vmatpush.bf16.msra.mxu0 %v2049
    %2192 = vmatpush.bf16.msra.mxu0 %v2042
    %2193 = vmatpush.bf16.msra.mxu0 %v2035
    %2194 = vmatmul.bf16.gmra.mxu0 %v1790
    %v2195 = vpop.f32.mrf.mxu0
    %v2196 = vadd.f32 0.0, %v2195
    %v2197 = vpop.f32.mrf.mxu0
    %v2198 = vadd.f32 0.0, %v2197
    %2199 = vdwg.mxu0
    %2200 = vmatpush.bf16.msra.mxu0 %v2085
    %2201 = vmatpush.bf16.msra.mxu0 %v2078
    %2202 = vmatpush.bf16.msra.mxu0 %v2071
    %2203 = vmatpush.bf16.msra.mxu0 %v2064
    %2204 = vmatpush.bf16.msra.mxu0 %v2057
    %2205 = vmatpush.bf16.msra.mxu0 %v2050
    %2206 = vmatpush.bf16.msra.mxu0 %v2043
    %2207 = vmatpush.bf16.msra.mxu0 %v2036
    %2208 = vmatmul.bf16.gmra.mxu0 %v1790
    %v2209 = vpop.f32.mrf.mxu0
    %v2210 = vadd.f32 0.0, %v2209
    %v2211 = vpop.f32.mrf.mxu0
    %v2212 = vadd.f32 0.0, %v2211
    %2213 = vdwg.mxu0
    %2214 = vmatpush.bf16.msra.mxu0 %v2086
    %2215 = vmatpush.bf16.msra.mxu0 %v2079
    %2216 = vmatpush.bf16.msra.mxu0 %v2072
    %2217 = vmatpush.bf16.msra.mxu0 %v2065
    %2218 = vmatpush.bf16.msra.mxu0 %v2058
    %2219 = vmatpush.bf16.msra.mxu0 %v2051
    %2220 = vmatpush.bf16.msra.mxu0 %v2044
    %2221 = vmatpush.bf16.msra.mxu0 %v2037
    %2222 = vmatmul.bf16.gmra.mxu0 %v1790
    %v2223 = vpop.f32.mrf.mxu0
    %v2224 = vadd.f32 0.0, %v2223
    %v2225 = vpop.f32.mrf.mxu0
    %v2226 = vadd.f32 0.0, %v2225
    %2227 = vdwg.mxu0
    %2228 = vmatpush.bf16.msra.mxu0 %v2087
    %2229 = vmatpush.bf16.msra.mxu0 %v2080
    %2230 = vmatpush.bf16.msra.mxu0 %v2073
    %2231 = vmatpush.bf16.msra.mxu0 %v2066
    %2232 = vmatpush.bf16.msra.mxu0 %v2059
    %2233 = vmatpush.bf16.msra.mxu0 %v2052
    %2234 = vmatpush.bf16.msra.mxu0 %v2045
    %2235 = vmatpush.bf16.msra.mxu0 %v2038
    %2236 = vmatmul.bf16.gmra.mxu0 %v1790
    %v2237 = vpop.f32.mrf.mxu0
    %v2238 = vadd.f32 0.0, %v2237
    %v2239 = vpop.f32.mrf.mxu0
    %v2240 = vadd.f32 0.0, %v2239
    %2241 = vdwg.mxu0
    %v2242 = vrot.slane %v2154, 5
    %v2243 = vrot.slane %v2156, 5
    %v2244 = vsel %vm580, %v2242, %v2243
    %v2245 = vsel %vm580, %v2243, %v2242
    %v2246 = vsel %vm583, %v2245, 0.0
    %v2247 = vsel %vm584, %v2244, 0.0
    %v2248 = vadd.f32 %v2196, %v2246
    %v2249 = vadd.f32 %v2198, %v2247
    %v2250 = vrot.slane %v2168, 6
    %v2251 = vrot.slane %v2170, 6
    %v2252 = vsel %vm591, %v2250, %v2251
    %v2253 = vsel %vm591, %v2251, %v2250
    %v2254 = vsel %vm594, %v2253, 0.0
    %v2255 = vsel %vm595, %v2252, 0.0
    %v2256 = vadd.f32 %v2248, %v2254
    %v2257 = vadd.f32 %v2249, %v2255
    %v2258 = vrot.slane %v2182, 7
    %v2259 = vrot.slane %v2184, 7
    %v2260 = vsel %vm602, %v2258, %v2259
    %v2261 = vsel %vm602, %v2259, %v2258
    %v2262 = vsel %vm605, %v2261, 0.0
    %v2263 = vsel %vm606, %v2260, 0.0
    %v2264 = vadd.f32 %v2256, %v2262
    %v2265 = vadd.f32 %v2257, %v2263
    %v2266 = vrot.slane %v2210, 1
    %v2267 = vrot.slane %v2212, 1
    %v2268 = vsel %vm613, %v2266, %v2267
    %v2269 = vsel %vm613, %v2267, %v2266
    %v2270 = vsel %vm616, %v2268, 0.0
    %v2271 = vsel %vm617, %v2269, 0.0
    %v2272 = vadd.f32 %v2264, %v2270
    %v2273 = vadd.f32 %v2265, %v2271
    %v2274 = vrot.slane %v2224, 2
    %v2275 = vrot.slane %v2226, 2
    %v2276 = vsel %vm624, %v2274, %v2275
    %v2277 = vsel %vm624, %v2275, %v2274
    %v2278 = vsel %vm627, %v2276, 0.0
    %v2279 = vsel %vm628, %v2277, 0.0
    %v2280 = vadd.f32 %v2272, %v2278
    %v2281 = vadd.f32 %v2273, %v2279
    %v2282 = vrot.slane %v2238, 3
    %v2283 = vrot.slane %v2240, 3
    %v2284 = vsel %vm635, %v2282, %v2283
    %v2285 = vsel %vm635, %v2283, %v2282
    %v2286 = vsel %vm638, %v2284, 0.0
    %v2287 = vsel %vm639, %v2285, 0.0
    %v2288 = vadd.f32 %v2280, %v2286
    %v2289 = vadd.f32 %v2281, %v2287
    %s2290 = scalar_lea.vmem %s2, 3
    %v2291 = vld [vmem:[%s2290] sm:$0x1]
    %v2293 = vperm.slane %v2291, 0
    %v2295 = vadd.f32 %v2288, %v2293
    %v2296 = vadd.f32 %v2289, %v2293
    %v2297 = vadd.f32 %v2295, %v1748
    %v2298 = vadd.f32 %v2296, %v1749
    %2299 = vadd.xlane.f32.xlu0 %v2297
    %v2300 = vpop.xlane.xlu0 %2299
    %2301 = vadd.xlane.f32.xlu0 %v2298
    %v2302 = vpop.xlane.xlu0 %2301
    %v2303 = vmul.f32 %v2300, %v90
    %v2304 = vmul.f32 %v2302, %v90
    %v2305 = vsub.f32 %v2297, %v2303
    %v2306 = vsub.f32 %v2298, %v2304
    %v2307 = vmul.f32 %v2305, %v2305
    %v2308 = vmul.f32 %v2306, %v2306
    %2309 = vadd.xlane.f32.xlu0 %v2307
    %v2310 = vpop.xlane.xlu0 %2309
    %2311 = vadd.xlane.f32.xlu0 %v2308
    %v2312 = vpop.xlane.xlu0 %2311
    %v2313 = vmul.f32 %v2310, %v90
    %v2314 = vmul.f32 %v2312, %v90
    %v2315 = vadd.f32 %v2313, 1e-05
    %v2316 = vadd.f32 %v2314, 1e-05
    %v2317 = vrsqrt.pop %v2315
    %v2318 = vmul.f32 %v2317, %v2315
    %v2319 = vmul.f32 %v2318, %v2317
    %v2320 = vmul.f32 0.5, %v2319
    %v2321 = vsub.f32 1.5, %v2320
    %v2322 = vmul.f32 %v2317, %v2321
    %vm2323 = vweird.f32 %v2315
    %vm2324 = vweird.f32 %v2317
    %vm2325 = vmor %vm2323, %vm2324
    %v2326 = vsel %vm2325, %v2317, %v2322
    %v2327 = vrsqrt.pop %v2316
    %v2328 = vmul.f32 %v2327, %v2316
    %v2329 = vmul.f32 %v2328, %v2327
    %v2330 = vmul.f32 0.5, %v2329
    %v2331 = vsub.f32 1.5, %v2330
    %v2332 = vmul.f32 %v2327, %v2331
    %vm2333 = vweird.f32 %v2316
    %vm2334 = vweird.f32 %v2327
    %vm2335 = vmor %vm2333, %vm2334
    %v2336 = vsel %vm2335, %v2327, %v2332
    %v2337 = vmul.f32 %v2305, %v2326
    %v2338 = vmul.f32 %v2306, %v2336
    %v2339 = vpack.c.bf16 %v2338, %v2337
    %v2340 = vld [vmem:[#allocation5] sm:$0xff]
    %v2341 = vld [vmem:[#allocation5 + $0x8] sm:$0xf]
    %v2342 = vld [vmem:[#allocation5 + $0xc] sm:$0xff]
    %v2343 = vld [vmem:[#allocation5 + $0x14] sm:$0xf]
    %v2344 = vld [vmem:[#allocation5 + $0x18] sm:$0xff]
    %v2345 = vld [vmem:[#allocation5 + $0x20] sm:$0xf]
    %v2346 = vld [vmem:[#allocation5 + $0x24] sm:$0xff]
    %v2347 = vld [vmem:[#allocation5 + $0x2c] sm:$0xf]
    %v2348 = vld [vmem:[#allocation5 + $0x30] sm:$0xff]
    %v2349 = vld [vmem:[#allocation5 + $0x38] sm:$0xf]
    %v2350 = vld [vmem:[#allocation5 + $0x3c] sm:$0xff]
    %v2351 = vld [vmem:[#allocation5 + $0x44] sm:$0xf]
    %v2352 = vld [vmem:[#allocation5 + $0x48] sm:$0xff]
    %v2353 = vld [vmem:[#allocation5 + $0x50] sm:$0xf]
    %v2354 = vld [vmem:[#allocation5 + $0x54] sm:$0xff]
    %v2355 = vld [vmem:[#allocation5 + $0x5c] sm:$0xf]
    %v2356 = vld [vmem:[#allocation5 + $0x60] sm:$0xff]
    %v2357 = vld [vmem:[#allocation5 + $0x68] sm:$0xf]
    %v2358 = vld [vmem:[#allocation5 + $0x6c] sm:$0xff]
    %v2359 = vld [vmem:[#allocation5 + $0x74] sm:$0xf]
    %v2360 = vld [vmem:[#allocation5 + $0x78] sm:$0xff]
    %v2361 = vld [vmem:[#allocation5 + $0x80] sm:$0xf]
    %v2362 = vld [vmem:[#allocation5 + $0x84] sm:$0xff]
    %v2363 = vld [vmem:[#allocation5 + $0x8c] sm:$0xf]
    %v2364 = vld [vmem:[#allocation5 + $0x90] sm:$0xff]
    %v2365 = vld [vmem:[#allocation5 + $0x98] sm:$0xf]
    %v2366 = vld [vmem:[#allocation5 + $0x9c] sm:$0xff]
    %v2367 = vld [vmem:[#allocation5 + $0xa4] sm:$0xf]
    %v2368 = vld [vmem:[#allocation5 + $0xa8] sm:$0xff]
    %v2369 = vld [vmem:[#allocation5 + $0xb0] sm:$0xf]
    %v2370 = vld [vmem:[#allocation5 + $0xb4] sm:$0xff]
    %v2371 = vld [vmem:[#allocation5 + $0xbc] sm:$0xf]
    %v2372 = vld [vmem:[%s4] sm:$0x7]
    %v2374 = vperm.slane %v2372, 0
    %v2375 = vperm.slane %v2372, 1
    %v2376 = vperm.slane %v2372, 2
    %v2412 = vunpack.c.l.b16 %v2340
    %v2413 = vunpack.c.h.b16 %v2340
    %v2414 = vunpack.c.l.b16 %v2341
    %v2415 = vunpack.c.l.b16 %v2342
    %v2416 = vunpack.c.h.b16 %v2342
    %v2417 = vunpack.c.l.b16 %v2343
    %v2418 = vunpack.c.l.b16 %v2344
    %v2419 = vunpack.c.h.b16 %v2344
    %v2420 = vunpack.c.l.b16 %v2345
    %v2421 = vunpack.c.l.b16 %v2346
    %v2422 = vunpack.c.h.b16 %v2346
    %v2423 = vunpack.c.l.b16 %v2347
    %v2424 = vunpack.c.l.b16 %v2348
    %v2425 = vunpack.c.h.b16 %v2348
    %v2426 = vunpack.c.l.b16 %v2349
    %v2427 = vunpack.c.l.b16 %v2350
    %v2428 = vunpack.c.h.b16 %v2350
    %v2429 = vunpack.c.l.b16 %v2351
    %v2430 = vunpack.c.l.b16 %v2352
    %v2431 = vunpack.c.h.b16 %v2352
    %v2432 = vunpack.c.l.b16 %v2353
    %v2433 = vunpack.c.l.b16 %v2354
    %v2434 = vunpack.c.h.b16 %v2354
    %v2435 = vunpack.c.l.b16 %v2355
    %v2436 = vunpack.c.l.b16 %v2356
    %v2437 = vunpack.c.h.b16 %v2356
    %v2438 = vunpack.c.l.b16 %v2357
    %v2439 = vunpack.c.l.b16 %v2358
    %v2440 = vunpack.c.h.b16 %v2358
    %v2441 = vunpack.c.l.b16 %v2359
    %v2442 = vunpack.c.l.b16 %v2360
    %v2443 = vunpack.c.h.b16 %v2360
    %v2444 = vunpack.c.l.b16 %v2361
    %v2445 = vunpack.c.l.b16 %v2362
    %v2446 = vunpack.c.h.b16 %v2362
    %v2447 = vunpack.c.l.b16 %v2363
    %v2448 = vunpack.c.l.b16 %v2364
    %v2449 = vunpack.c.h.b16 %v2364
    %v2450 = vunpack.c.l.b16 %v2365
    %v2451 = vunpack.c.l.b16 %v2366
    %v2452 = vunpack.c.h.b16 %v2366
    %v2453 = vunpack.c.l.b16 %v2367
    %v2454 = vunpack.c.l.b16 %v2368
    %v2455 = vunpack.c.h.b16 %v2368
    %v2456 = vunpack.c.l.b16 %v2369
    %v2457 = vunpack.c.l.b16 %v2370
    %v2458 = vunpack.c.h.b16 %v2370
    %v2459 = vunpack.c.l.b16 %v2371
    %v2460 = vpack.c.b16 %v2415, %v2412
    %v2461 = vpack.c.b16 %v2416, %v2413
    %v2462 = vpack.c.b16 %v2417, %v2414
    %v2463 = vpack.c.b16 %v2421, %v2418
    %v2464 = vpack.c.b16 %v2422, %v2419
    %v2465 = vpack.c.b16 %v2423, %v2420
    %v2466 = vpack.c.b16 %v2427, %v2424
    %v2467 = vpack.c.b16 %v2428, %v2425
    %v2468 = vpack.c.b16 %v2429, %v2426
    %v2469 = vpack.c.b16 %v2433, %v2430
    %v2470 = vpack.c.b16 %v2434, %v2431
    %v2471 = vpack.c.b16 %v2435, %v2432
    %v2472 = vpack.c.b16 %v2439, %v2436
    %v2473 = vpack.c.b16 %v2440, %v2437
    %v2474 = vpack.c.b16 %v2441, %v2438
    %v2475 = vpack.c.b16 %v2445, %v2442
    %v2476 = vpack.c.b16 %v2446, %v2443
    %v2477 = vpack.c.b16 %v2447, %v2444
    %v2478 = vpack.c.b16 %v2451, %v2448
    %v2479 = vpack.c.b16 %v2452, %v2449
    %v2480 = vpack.c.b16 %v2453, %v2450
    %v2481 = vpack.c.b16 %v2457, %v2454
    %v2482 = vpack.c.b16 %v2458, %v2455
    %v2483 = vpack.c.b16 %v2459, %v2456
    %2508 = vmatpush.bf16.msra.mxu0 %v2481
    %2509 = vmatpush.bf16.msra.mxu0 %v2478
    %2510 = vmatpush.bf16.msra.mxu0 %v2475
    %2511 = vmatpush.bf16.msra.mxu0 %v2472
    %2512 = vmatpush.bf16.msra.mxu0 %v2469
    %2513 = vmatpush.bf16.msra.mxu0 %v2466
    %2514 = vmatpush.bf16.msra.mxu0 %v2463
    %2515 = vmatpush.bf16.msra.mxu0 %v2460
    %2516 = vmatmul.bf16.gmra.mxu0 %v2339
    %v2517 = vpop.f32.mrf.mxu0
    %v2518 = vadd.f32 %v2374, %v2517
    %v2519 = vpop.f32.mrf.mxu0
    %v2520 = vadd.f32 %v2374, %v2519
    %2521 = vdwg.mxu0
    %2522 = vmatpush.bf16.msra.mxu0 %v2482
    %2523 = vmatpush.bf16.msra.mxu0 %v2479
    %2524 = vmatpush.bf16.msra.mxu0 %v2476
    %2525 = vmatpush.bf16.msra.mxu0 %v2473
    %2526 = vmatpush.bf16.msra.mxu0 %v2470
    %2527 = vmatpush.bf16.msra.mxu0 %v2467
    %2528 = vmatpush.bf16.msra.mxu0 %v2464
    %2529 = vmatpush.bf16.msra.mxu0 %v2461
    %2530 = vmatmul.bf16.gmra.mxu0 %v2339
    %v2531 = vpop.f32.mrf.mxu0
    %v2532 = vadd.f32 %v2375, %v2531
    %v2533 = vpop.f32.mrf.mxu0
    %v2534 = vadd.f32 %v2375, %v2533
    %2535 = vdwg.mxu0
    %2536 = vmatpush.bf16.msra.mxu0 %v2483
    %2537 = vmatpush.bf16.msra.mxu0 %v2480
    %2538 = vmatpush.bf16.msra.mxu0 %v2477
    %2539 = vmatpush.bf16.msra.mxu0 %v2474
    %2540 = vmatpush.bf16.msra.mxu0 %v2471
    %2541 = vmatpush.bf16.msra.mxu0 %v2468
    %2542 = vmatpush.bf16.msra.mxu0 %v2465
    %2543 = vmatpush.bf16.msra.mxu0 %v2462
    %2544 = vmatmul.bf16.gmra.mxu0 %v2339
    %v2545 = vpop.f32.mrf.mxu0
    %v2546 = vadd.f32 %v2376, %v2545
    %v2547 = vpop.f32.mrf.mxu0
    %v2548 = vadd.f32 %v2376, %v2547
    %2549 = vdwg.mxu0
    %v2550 = vpack.c.bf16 %v2520, %v2518
    %v2551 = vpack.c.bf16 %v2534, %v2532
    %2552 = vmatpush.bf16.xpose.msra.mxu0 0
    %2553 = vmatpush.bf16.xpose.msra.mxu0 0
    %2554 = vmatpush.bf16.xpose.msra.mxu0 0
    %2555 = vmatpush.bf16.xpose.msra.mxu0 0
    %2556 = vmatpush.bf16.xpose.msra.mxu0 0
    %2557 = vmatpush.bf16.xpose.msra.mxu0 0
    %2558 = vmatpush.bf16.xpose.msra.mxu0 0
    %2559 = vmatpush.bf16.xpose.msra.mxu0 %v2551
    %2560 = vmatmul.bf16.gmra.mxu0 %v2550
    %v2561 = vpop.f32.mrf.mxu0
    %v2562 = vadd.f32 0.0, %v2561
    %v2563 = vpop.f32.mrf.mxu0
    %v2564 = vadd.f32 0.0, %v2563
    %2565 = vdwg.mxu0
    %vm2566 = vcmask 130048
    %v2567 = vsel %vm2566, %v2562, -inf
    %2568 = vmax.xlane.f32.xlu0 %v2567
    %v2569 = vpop.xlane.xlu0 %2568
    %v2570 = vsel %vm2566, %v2564, -inf
    %2571 = vmax.xlane.f32.xlu0 %v2570
    %v2572 = vpop.xlane.xlu0 %2571
    %v2573 = vsub.f32 %v2562, %v2569
    %v2574 = vsub.f32 %v2564, %v2572
    %v2575 = vmul.f32 %v2573, 1.442695
    %v2576 = vpow.pop %v2575
    %v2577 = vmul.f32 %v2574, 1.442695
    %v2578 = vpow.pop %v2577
    %v2579 = vsel %vm2566, %v2576, 0.0
    %2580 = vadd.xlane.f32.xlu0 %v2579
    %v2581 = vpop.xlane.xlu0 %2580
    %v2582 = vsel %vm2566, %v2578, 0.0
    %2583 = vadd.xlane.f32.xlu0 %v2582
    %v2584 = vpop.xlane.xlu0 %2583
    %v2585 = vrcp.pop %v2581
    %v2586 = vrcp.pop %v2584
    %v2587 = vmul.f32 %v2576, %v2585
    %v2588 = vmul.f32 %v2578, %v2586
    %v2589 = vpack.c.bf16 %v2588, %v2587
    %v2590 = vpack.c.bf16 %v2548, %v2546
    %v2592 = vsel %vm2566, %v2589, 0
    %2594 = vmatpush.bf16.msra.mxu0 0
    %2595 = vmatpush.bf16.msra.mxu0 0
    %2596 = vmatpush.bf16.msra.mxu0 0
    %2597 = vmatpush.bf16.msra.mxu0 0
    %2598 = vmatpush.bf16.msra.mxu0 0
    %2599 = vmatpush.bf16.msra.mxu0 0
    %2600 = vmatpush.bf16.msra.mxu0 0
    %2601 = vmatpush.bf16.msra.mxu0 %v2590
    %2602 = vmatmul.bf16.gmra.mxu0 %v2592
    %v2603 = vpop.f32.mrf.mxu0
    %v2604 = vadd.f32 %v2297, %v2603
    %v2605 = vpop.f32.mrf.mxu0
    %v2606 = vadd.f32 %v2298, %v2605
    %2607 = vdwg.mxu0
    %2608 = vadd.xlane.f32.xlu0 %v2604
    %v2609 = vpop.xlane.xlu0 %2608
    %2610 = vadd.xlane.f32.xlu0 %v2606
    %v2611 = vpop.xlane.xlu0 %2610
    %v2612 = vmul.f32 %v2609, %v90
    %v2613 = vmul.f32 %v2611, %v90
    %v2614 = vsub.f32 %v2604, %v2612
    %v2615 = vsub.f32 %v2606, %v2613
    %v2616 = vmul.f32 %v2614, %v2614
    %v2617 = vmul.f32 %v2615, %v2615
    %2618 = vadd.xlane.f32.xlu0 %v2616
    %v2619 = vpop.xlane.xlu0 %2618
    %2620 = vadd.xlane.f32.xlu0 %v2617
    %v2621 = vpop.xlane.xlu0 %2620
    %v2622 = vmul.f32 %v2619, %v90
    %v2623 = vmul.f32 %v2621, %v90
    %v2624 = vadd.f32 %v2622, 1e-05
    %v2625 = vadd.f32 %v2623, 1e-05
    %v2626 = vrsqrt.pop %v2624
    %v2627 = vmul.f32 %v2626, %v2624
    %v2628 = vmul.f32 %v2627, %v2626
    %v2629 = vmul.f32 0.5, %v2628
    %v2630 = vsub.f32 1.5, %v2629
    %v2631 = vmul.f32 %v2626, %v2630
    %vm2632 = vweird.f32 %v2624
    %vm2633 = vweird.f32 %v2626
    %vm2634 = vmor %vm2632, %vm2633
    %v2635 = vsel %vm2634, %v2626, %v2631
    %v2636 = vrsqrt.pop %v2625
    %v2637 = vmul.f32 %v2636, %v2625
    %v2638 = vmul.f32 %v2637, %v2636
    %v2639 = vmul.f32 0.5, %v2638
    %v2640 = vsub.f32 1.5, %v2639
    %v2641 = vmul.f32 %v2636, %v2640
    %vm2642 = vweird.f32 %v2625
    %vm2643 = vweird.f32 %v2636
    %vm2644 = vmor %vm2642, %vm2643
    %v2645 = vsel %vm2644, %v2636, %v2641
    %v2646 = vmul.f32 %v2614, %v2635
    %v2647 = vmul.f32 %v2615, %v2645
    %v2648 = vpack.c.bf16 %v2647, %v2646
    %v2649 = vld [vmem:[#allocation7] sm:$0xf]
    %v2650 = vld [vmem:[#allocation7 + $0x4] sm:$0xf]
    %v2651 = vld [vmem:[#allocation7 + $0x8] sm:$0xf]
    %v2652 = vld [vmem:[#allocation7 + $0xc] sm:$0xf]
    %v2653 = vld [vmem:[#allocation7 + $0x10] sm:$0xf]
    %v2654 = vld [vmem:[#allocation7 + $0x14] sm:$0xf]
    %v2655 = vld [vmem:[#allocation7 + $0x18] sm:$0xf]
    %v2656 = vld [vmem:[#allocation7 + $0x1c] sm:$0xf]
    %v2657 = vld [vmem:[#allocation7 + $0x20] sm:$0xf]
    %v2658 = vld [vmem:[#allocation7 + $0x24] sm:$0xf]
    %v2659 = vld [vmem:[#allocation7 + $0x28] sm:$0xf]
    %v2660 = vld [vmem:[#allocation7 + $0x2c] sm:$0xf]
    %v2661 = vld [vmem:[#allocation7 + $0x30] sm:$0xf]
    %v2662 = vld [vmem:[#allocation7 + $0x34] sm:$0xf]
    %v2663 = vld [vmem:[#allocation7 + $0x38] sm:$0xf]
    %v2664 = vld [vmem:[#allocation7 + $0x3c] sm:$0xf]
    %v2665 = vld [vmem:[%s6] sm:$0x1]
    %v2667 = vperm.slane %v2665, 0
    %v2685 = vunpack.c.l.b16 %v2649
    %v2686 = vunpack.c.l.b16 %v2650
    %v2687 = vunpack.c.l.b16 %v2651
    %v2688 = vunpack.c.l.b16 %v2652
    %v2689 = vunpack.c.l.b16 %v2653
    %v2690 = vunpack.c.l.b16 %v2654
    %v2691 = vunpack.c.l.b16 %v2655
    %v2692 = vunpack.c.l.b16 %v2656
    %v2693 = vunpack.c.l.b16 %v2657
    %v2694 = vunpack.c.l.b16 %v2658
    %v2695 = vunpack.c.l.b16 %v2659
    %v2696 = vunpack.c.l.b16 %v2660
    %v2697 = vunpack.c.l.b16 %v2661
    %v2698 = vunpack.c.l.b16 %v2662
    %v2699 = vunpack.c.l.b16 %v2663
    %v2700 = vunpack.c.l.b16 %v2664
    %v2701 = vpack.c.b16 %v2686, %v2685
    %v2702 = vpack.c.b16 %v2688, %v2687
    %v2703 = vpack.c.b16 %v2690, %v2689
    %v2704 = vpack.c.b16 %v2692, %v2691
    %v2705 = vpack.c.b16 %v2694, %v2693
    %v2706 = vpack.c.b16 %v2696, %v2695
    %v2707 = vpack.c.b16 %v2698, %v2697
    %v2708 = vpack.c.b16 %v2700, %v2699
    %2717 = vmatpush.bf16.msra.mxu0 %v2708
    %2718 = vmatpush.bf16.msra.mxu0 %v2707
    %2719 = vmatpush.bf16.msra.mxu0 %v2706
    %2720 = vmatpush.bf16.msra.mxu0 %v2705
    %2721 = vmatpush.bf16.msra.mxu0 %v2704
    %2722 = vmatpush.bf16.msra.mxu0 %v2703
    %2723 = vmatpush.bf16.msra.mxu0 %v2702
    %2724 = vmatpush.bf16.msra.mxu0 %v2701
    %2725 = vmatmul.bf16.gmra.mxu0 %v2648
    %v2726 = vpop.f32.mrf.mxu0
    %v2727 = vadd.f32 %v2667, %v2726
    %v2728 = vpop.f32.mrf.mxu0
    %v2729 = vadd.f32 %v2667, %v2728
    %2730 = vdwg.mxu0
    %v2731 = vmax.f32 %v2727, 0.0
    %v2732 = vmax.f32 %v2729, 0.0
    %v2733 = vadd.f32 %v2731, %v2604
    %v2734 = vadd.f32 %v2732, %v2606
    %2735 = vst [vmem:[#allocation8] sm:$0xff] %v2733
    %2736 = vst [vmem:[#allocation8 + $0x8] sm:$0xff] %v2734
    // Predicated region
    $region42: #{encoder_block_forward.1} parent=1 // pred_check
      _
    $region43: #{encoder_block_forward.1} parent=1 // pred_check_branch
      %2738 = sbr.rel (0) target = $region45
    $region44: #{encoder_block_forward.1} parent=1 // pred_region
      %2740 = vsyncadd [#allocation4], 0
      %s2741 = sshll.u32 [#allocation8], 4
      %s2742 = int_to_ptr.vmem [resolvable:$true] %s2741
      %s2743 = sshll.u32 %s7, 4
      %s2744 = int_to_ptr.hbm [resolvable:$true] %s2743
      %2749 = dma.vmem_to_hbm [thread:$0]  %s2742, 256, %s2744, [#allocation4], 128, 128, 8
    $region45: #{encoder_block_forward.1} parent=1 // pred_fallthru
      _
    // Predicated region
    $region46: #{encoder_block_forward.1} parent=1 // pred_check
      _
    $region47: #{encoder_block_forward.1} parent=1 // pred_check_branch
      %2751 = sbr.rel (0) target = $region49
    $region48: #{encoder_block_forward.1} parent=1 // pred_region
      %2753 = dma.done [#allocation4], 256
    $region49: #{encoder_block_forward.1} parent=1 // pred_fallthru
      _
    %2754 = vsyncpa [#allocation3], 1
    %2755 = vsyncpa [#allocation6], 1
    %2756 = vsyncpa [#allocation4], 1

</llo_original>
